<compile_context>
chip_gen: v7x
topology: tpu7x:2x2x1
jax: 0.10.0
libtpu: 0.0.40
codegen_flags: <defaults>
</compile_context>

<pallas_src>
import jax
import jax.numpy as jnp
from jax import lax
from jax.experimental import pallas as pl
from jax.experimental.pallas import tpu as pltpu
import numpy as np


def _round_up(x, m):
    return ((x + m - 1) // m) * m


def _ct_tap(parity, d):
    """ConvTranspose(k=3, s=2, p=1) tap index for output parity and input offset d.

    Output row 2*i+parity receives h[i+d] * w[..., k]; returns k or None (no tap).
    """
    if parity == 0:
        return 1 if d == 0 else None
    return 2 if d == 0 else 0


# --------------------------------------------------------------------------- #
# Fused Pallas kernel: conv3x3+ReLU  ->  4-phase convtranspose+ReLU            #
# --------------------------------------------------------------------------- #
def _make_decoder_kernel(Cin_pad, Cmid_pad, Wp, LOUT_pad, NB, LH):
    NBL = NB * LOUT_pad

    def kernel(x_ref, mask_ref, w1_ref, b1_ref, w2_ref, b2_ref, o_ref,
               taps1_ref, h_ref):
        # x_ref   : (NB, Cin_pad, L1)   padded images, rows flattened, lane-padded
        # mask_ref: (1, NBL)            1.0 where (col % Wp) < W and col < LOUT
        # w1_ref  : (Cmid_pad, 9*Cin_pad)  conv1 weights, tap-major, sublane-aligned
        # b1_ref  : (Cmid_pad, 1)
        # w2_ref  : (4, CO4, Cmid_pad)  4 sub-pixel tap blocks
        # b2_ref  : (CO4, 1)
        # o_ref   : (1, CO4, NBL)       4 phase outputs, row-padded flat layout

        # ---- Stage 1: Conv2d(3x3, pad=1) + ReLU as a single K=9*Cin_pad dot.
        # Every tap copy destination starts at a sublane multiple of 8 and a lane
        # multiple of 128 -> plain aligned dense stores.
        for b in range(NB):
            base = b * LOUT_pad
            for t in range(9):
                kh, kw = t // 3, t % 3
                off = kh * Wp + kw          # in-bounds: L1 >= 2*Wp+2 + LOUT_pad
                taps1_ref[t * Cin_pad:(t + 1) * Cin_pad,
                          base:base + LOUT_pad] = x_ref[b, :, off:off + LOUT_pad]
        h_pre = jnp.dot(w1_ref[...], taps1_ref[...],
                        preferred_element_type=jnp.float32)
        # bias + ReLU; mask zeros the row-pad columns AND the lane-pad tail so
        # stage 2 sees true zero padding (incl. the synthetic bottom pad row).
        h_ref[:, :NBL] = jnp.maximum(h_pre + b1_ref[...], 0.0) * mask_ref[...]
        # Only the small 128-lane tail needs clearing (not the whole buffer).
        h_ref[:, NBL:] = jnp.zeros((Cmid_pad, LH - NBL), jnp.float32)

        # ---- Stage 2: ConvTranspose2d(k=3, s=2, p=1, op=1) + ReLU as 4 sub-pixel
        # accumulated dots against shifted views of h (no taps2 materialization,
        # no zero-inserted pixels are ever multiplied).
        offs = (0, 1, Wp, Wp + 1)
        acc = jnp.dot(w2_ref[0], h_ref[:, 0:NBL],
                      preferred_element_type=jnp.float32)
        for t in range(1, 4):
            off = offs[t]
            acc = acc + jnp.dot(w2_ref[t], h_ref[:, off:off + NBL],
                                preferred_element_type=jnp.float32)
        o_ref[0] = jnp.maximum(acc + b2_ref[...], 0.0)

    return kernel


# --------------------------------------------------------------------------- #
# Wrapper                                                                      #
# --------------------------------------------------------------------------- #
def decoder_block_forward(x_nchw, params):
    """Pallas implementation of DecoderBlock.forward. x_nchw: (N, Cin, H, W)."""
    w1, b1 = params["w1"], params["b1"]   # (Cmid, Cin, 3, 3), (Cmid,)
    w2, b2 = params["w2"], params["b2"]   # (Cmid, Cout, 3, 3), (Cout,)

    N, Cin, H, W = x_nchw.shape
    Cmid = w1.shape[0]
    Cout = w2.shape[1]
    f32 = jnp.float32

    Hp, Wp = H + 2, W + 2
    LOUT = H * Wp
    LOUT_pad = _round_up(LOUT, 128)          # lane-dense output / h / tap width
    Cin_pad = _round_up(Cin, 8)              # sublane-aligned per-tap stride
    Cmid_pad = _round_up(Cmid, 8)
    CO4 = _round_up(4 * Cout, 8)

    # Images packed per grid step along lanes (amortizes per-step overhead and
    # feeds wide MXU lanes). For N>=4 this still leaves >=2 parallel grid steps
    # for v7x's two TensorCores.
    NB = max(1, min(N, 1024 // LOUT_pad))
    G = -(-N // NB)
    Npad = G * NB
    NBL = NB * LOUT_pad

    # Flat padded-image slab length: must cover the largest shifted in-kernel
    # read (off_max = 2*Wp+2) so no VMEM read is out of bounds.
    L1 = _round_up(2 * Wp + 2 + LOUT_pad, 128)
    assert L1 >= 2 * Wp + 2 + LOUT_pad
    LH = _round_up(NBL + Wp + 1, 128)        # h scratch covers stage-2 shifts

    # ---- input prep: zero-pad (batch->Npad, chan->Cin_pad, spatial pad=1),
    #      flatten rows, lane-pad (the zero tail keeps shifted reads finite) ---
    x = x_nchw.astype(f32)
    x_pad = jnp.pad(x, ((0, Npad - N), (0, Cin_pad - Cin), (1, 1), (1, 1)))
    x_flat = x_pad.reshape(Npad, Cin_pad, Hp * Wp)
    x_flat = jnp.pad(x_flat, ((0, 0), (0, 0), (0, L1 - Hp * Wp)))

    # validity mask for the lane-padded row-flat layout (per image, tiled)
    lidx = jnp.arange(LOUT_pad)
    m = ((lidx % Wp) < W) & (lidx < LOUT)
    mask = jnp.tile(m.astype(f32), NB).reshape(1, NBL)

    # ---- weight prep ----------------------------------------------------------
    # conv1: (Cmid, Cin, kh, kw) -> (Cmid_pad, 9*Cin_pad), tap-major, padded
    w1_taps = jnp.transpose(w1.astype(f32), (2, 3, 0, 1)).reshape(9, Cmid, Cin)
    w1_taps = jnp.pad(w1_taps, ((0, 0), (0, Cmid_pad - Cmid), (0, Cin_pad - Cin)))
    w1_mat = jnp.transpose(w1_taps, (1, 0, 2)).reshape(Cmid_pad, 9 * Cin_pad)
    b1_col = jnp.pad(b1.astype(f32), (0, Cmid_pad - Cmid)).reshape(Cmid_pad, 1)

    # convT: (4 taps, CO4, Cmid_pad). Tap t = dkh*2+dkw; rows = phase p*Cout+o,
    # phase p = a*2+b (output parities). Entry = w2[c, o, kh, kw] or 0.
    w2f = w2.astype(f32)
    blocks = []
    for dkh in range(2):
        for dkw in range(2):
            rows = []
            for a in range(2):
                for b_ in range(2):
                    kh, kw = _ct_tap(a, dkh), _ct_tap(b_, dkw)
                    if kh is None or kw is None:
                        rows.append(jnp.zeros((Cout, Cmid), f32))
                    else:
                        rows.append(w2f[:, :, kh, kw].T)        # (Cout, Cmid)
            blk = jnp.concatenate(rows, axis=0)                 # (4*Cout, Cmid)
            blk = jnp.pad(blk, ((0, CO4 - 4 * Cout), (0, Cmid_pad - Cmid)))
            blocks.append(blk)
    w2_blocks = jnp.stack(blocks, axis=0)                       # (4, CO4, Cmid_pad)
    b2_col = jnp.pad(jnp.tile(b2.astype(f32), 4),
                     (0, CO4 - 4 * Cout)).reshape(CO4, 1)

    # ---- fused Pallas call ----------------------------------------------------
    kernel = _make_decoder_kernel(Cin_pad, Cmid_pad, Wp, LOUT_pad, NB, LH)
    out = pl.pallas_call(
        kernel,
        out_shape=jax.ShapeDtypeStruct((G, CO4, NBL), f32),
        grid=(G,),
        in_specs=[
            pl.BlockSpec((NB, Cin_pad, L1), lambda g: (g, 0, 0)),
            pl.BlockSpec((1, NBL), lambda g: (0, 0)),
            pl.BlockSpec((Cmid_pad, 9 * Cin_pad), lambda g: (0, 0)),
            pl.BlockSpec((Cmid_pad, 1), lambda g: (0, 0)),
            pl.BlockSpec((4, CO4, Cmid_pad), lambda g: (0, 0, 0)),
            pl.BlockSpec((CO4, 1), lambda g: (0, 0)),
        ],
        out_specs=pl.BlockSpec((1, CO4, NBL), lambda g: (g, 0, 0)),
        scratch_shapes=[
            pltpu.VMEM((9 * Cin_pad, NBL), f32),   # conv1 tap matrix (aligned)
            pltpu.VMEM((Cmid_pad, LH), f32),       # fused intermediate h
        ],
        # Scratch footprint is tiny at these sizes; for production sizes add a
        # row-block grid axis and set vmem_limit_bytes (v7x has 64 MiB VMEM).
        compiler_params=pltpu.CompilerParams(
            dimension_semantics=("parallel",)),
    )(x_flat, mask, w1_mat, b1_col, w2_blocks, b2_col)

    # ---- crop padding + interleave the 4 sub-pixel phases ---------------------
    # TODO(synk): the 6-D phase-interleave transpose stays in XLA; fuse into the
    # consumer's kernel (or its out index_map) when chaining decoder blocks.
    y = out.reshape(G, CO4, NB, LOUT_pad)
    y = jnp.transpose(y, (0, 2, 1, 3)).reshape(Npad, CO4, LOUT_pad)
    y = y[:N, :4 * Cout, :LOUT]
    y = y.reshape(N, 2, 2, Cout, H, Wp)[..., :W]                # (N, a, b, O, H, W)
    y = jnp.transpose(y, (0, 3, 4, 1, 5, 2)).reshape(N, Cout, 2 * H, 2 * W)
    return y


# --------------------------------------------------------------------------- #
# Pure-JAX reference (lax convs) for correctness checking                      #
# --------------------------------------------------------------------------- #
def decoder_block_reference(x_nchw, params):
    w1, b1, w2, b2 = params["w1"], params["b1"], params["w2"], params["b2"]
    h = lax.conv_general_dilated(
        x_nchw, w1, window_strides=(1, 1), padding=((1, 1), (1, 1)),
        dimension_numbers=("NCHW", "OIHW", "NCHW"))
    h = jnp.maximum(h + b1[None, :, None, None], 0.0)
    # conv_transpose(k=3, s=2, p=1, op=1) == dilated conv with flipped kernel
    w2c = jnp.transpose(w2, (1, 0, 2, 3))[:, :, ::-1, ::-1]
    y = lax.conv_general_dilated(
        h, w2c, window_strides=(1, 1), padding=((1, 2), (1, 2)),
        lhs_dilation=(2, 2), dimension_numbers=("NCHW", "OIHW", "NCHW"))
    return jnp.maximum(y + b2[None, :, None, None], 0.0)


# --------------------------------------------------------------------------- #
if __name__ == "__main__":
    in_channels, middle_channels, out_channels = 4, 8, 6
    N, H, W = 2, 16, 16

    key = jax.random.PRNGKey(0)
    k_x, k_w1, k_b1, k_w2, k_b2 = jax.random.split(key, 5)

    x = jax.random.normal(k_x, (N, in_channels, H, W), dtype=jnp.float32)
    params = {
        # Conv2d weight (out, in, kH, kW) — PyTorch OIHW
        "w1": jax.random.normal(k_w1, (middle_channels, in_channels, 3, 3), jnp.float32) * 0.1,
        "b1": jax.random.normal(k_b1, (middle_channels,), jnp.float32) * 0.1,
        # ConvTranspose2d weight (in, out, kH, kW) — PyTorch layout
        "w2": jax.random.normal(k_w2, (middle_channels, out_channels, 3, 3), jnp.float32) * 0.1,
        "b2": jax.random.normal(k_b2, (out_channels,), jnp.float32) * 0.1,
    }

    out = jax.jit(decoder_block_forward)(x, params)
    out = jax.block_until_ready(out)

    ref = jax.block_until_ready(decoder_block_reference(x, params))
    assert out.shape == (N, out_channels, 2 * H, 2 * W), out.shape
    np.testing.assert_allclose(np.asarray(out), np.asarray(ref), atol=5e-4, rtol=5e-4)

    print("KERNEL_OK")
</pallas_src>

<mosaic_0001>
module attributes {stable_mosaic.version = 11 : i64} {
  func.func @kernel(%arg0: i32, %arg1: memref<2x8x512xf32, #tpu.memory_space<vmem>>, %arg2: memref<1x768xf32, #tpu.memory_space<vmem>>, %arg3: memref<8x72xf32, #tpu.memory_space<vmem>>, %arg4: memref<8x1xf32, #tpu.memory_space<vmem>>, %arg5: memref<4x24x8xf32, #tpu.memory_space<vmem>>, %arg6: memref<24x1xf32, #tpu.memory_space<vmem>>, %arg7: memref<1x24x768xf32, #tpu.memory_space<vmem>>, %arg8: memref<72x768xf32, #tpu.memory_space<vmem>>, %arg9: memref<8x896xf32, #tpu.memory_space<vmem>>) attributes {dimension_semantics = [#tpu.dimension_semantics<parallel>], iteration_bounds = array<i64: 1>, scalar_prefetch = 0 : i64, scratch_operands = 2 : i64, tpu.core_type = #tpu.core_type<tc>, window_params = [{transform_indices = @transform_0, window_bounds = array<i64: 2, 8, 512>}, {pipeline_mode = #tpu.pipeline_mode<synchronous>, transform_indices = @transform_1, window_bounds = array<i64: 1, 768>}, {pipeline_mode = #tpu.pipeline_mode<synchronous>, transform_indices = @transform_2, window_bounds = array<i64: 8, 72>}, {pipeline_mode = #tpu.pipeline_mode<synchronous>, transform_indices = @transform_3, window_bounds = array<i64: 8, 1>}, {pipeline_mode = #tpu.pipeline_mode<synchronous>, transform_indices = @transform_4, window_bounds = array<i64: 4, 24, 8>}, {pipeline_mode = #tpu.pipeline_mode<synchronous>, transform_indices = @transform_5, window_bounds = array<i64: 24, 1>}, {transform_indices = @transform_6, window_bounds = array<i64: 1, 24, 768>}]} {
    %c0 = arith.constant 0 : index
    %c0_0 = arith.constant 0 : index
    %c0_1 = arith.constant 0 : index
    %0 = vector.load %arg1[%c0, %c0_0, %c0_1] : memref<2x8x512xf32, #tpu.memory_space<vmem>>, vector<1x8x384xf32>
    %1 = vector.shape_cast %0 : vector<1x8x384xf32> to vector<8x384xf32>
    %c0_2 = arith.constant 0 : index
    %c0_3 = arith.constant 0 : index
    %2 = vector.load %arg8[%c0_2, %c0_3] : memref<72x768xf32, #tpu.memory_space<vmem>>, vector<8x384xf32>
    tpu.vector_store %arg8[%c0_2, %c0_3], %1 {strides = array<i32>} : memref<72x768xf32, #tpu.memory_space<vmem>>, vector<8x384xf32>,
    %c0_4 = arith.constant 0 : index
    %c0_5 = arith.constant 0 : index
    %c1 = arith.constant 1 : index
    %3 = vector.load %arg1[%c0_4, %c0_5, %c1] : memref<2x8x512xf32, #tpu.memory_space<vmem>>, vector<1x8x384xf32>
    %4 = vector.shape_cast %3 : vector<1x8x384xf32> to vector<8x384xf32>
    %c8 = arith.constant 8 : index
    %c0_6 = arith.constant 0 : index
    %5 = vector.load %arg8[%c8, %c0_6] : memref<72x768xf32, #tpu.memory_space<vmem>>, vector<8x384xf32>
    tpu.vector_store %arg8[%c8, %c0_6], %4 {strides = array<i32>} : memref<72x768xf32, #tpu.memory_space<vmem>>, vector<8x384xf32>,
    %c0_7 = arith.constant 0 : index
    %c0_8 = arith.constant 0 : index
    %c2 = arith.constant 2 : index
    %6 = vector.load %arg1[%c0_7, %c0_8, %c2] : memref<2x8x512xf32, #tpu.memory_space<vmem>>, vector<1x8x384xf32>
    %7 = vector.shape_cast %6 : vector<1x8x384xf32> to vector<8x384xf32>
    %c16 = arith.constant 16 : index
    %c0_9 = arith.constant 0 : index
    %8 = vector.load %arg8[%c16, %c0_9] : memref<72x768xf32, #tpu.memory_space<vmem>>, vector<8x384xf32>
    tpu.vector_store %arg8[%c16, %c0_9], %7 {strides = array<i32>} : memref<72x768xf32, #tpu.memory_space<vmem>>, vector<8x384xf32>,
    %c0_10 = arith.constant 0 : index
    %c0_11 = arith.constant 0 : index
    %c18 = arith.constant 18 : index
    %9 = vector.load %arg1[%c0_10, %c0_11, %c18] : memref<2x8x512xf32, #tpu.memory_space<vmem>>, vector<1x8x384xf32>
    %10 = vector.shape_cast %9 : vector<1x8x384xf32> to vector<8x384xf32>
    %c24 = arith.constant 24 : index
    %c0_12 = arith.constant 0 : index
    %11 = vector.load %arg8[%c24, %c0_12] : memref<72x768xf32, #tpu.memory_space<vmem>>, vector<8x384xf32>
    tpu.vector_store %arg8[%c24, %c0_12], %10 {strides = array<i32>} : memref<72x768xf32, #tpu.memory_space<vmem>>, vector<8x384xf32>,
    %c0_13 = arith.constant 0 : index
    %c0_14 = arith.constant 0 : index
    %c19 = arith.constant 19 : index
    %12 = vector.load %arg1[%c0_13, %c0_14, %c19] : memref<2x8x512xf32, #tpu.memory_space<vmem>>, vector<1x8x384xf32>
    %13 = vector.shape_cast %12 : vector<1x8x384xf32> to vector<8x384xf32>
    %c32 = arith.constant 32 : index
    %c0_15 = arith.constant 0 : index
    %14 = vector.load %arg8[%c32, %c0_15] : memref<72x768xf32, #tpu.memory_space<vmem>>, vector<8x384xf32>
    tpu.vector_store %arg8[%c32, %c0_15], %13 {strides = array<i32>} : memref<72x768xf32, #tpu.memory_space<vmem>>, vector<8x384xf32>,
    %c0_16 = arith.constant 0 : index
    %c0_17 = arith.constant 0 : index
    %c20 = arith.constant 20 : index
    %15 = vector.load %arg1[%c0_16, %c0_17, %c20] : memref<2x8x512xf32, #tpu.memory_space<vmem>>, vector<1x8x384xf32>
    %16 = vector.shape_cast %15 : vector<1x8x384xf32> to vector<8x384xf32>
    %c40 = arith.constant 40 : index
    %c0_18 = arith.constant 0 : index
    %17 = vector.load %arg8[%c40, %c0_18] : memref<72x768xf32, #tpu.memory_space<vmem>>, vector<8x384xf32>
    tpu.vector_store %arg8[%c40, %c0_18], %16 {strides = array<i32>} : memref<72x768xf32, #tpu.memory_space<vmem>>, vector<8x384xf32>,
    %c0_19 = arith.constant 0 : index
    %c0_20 = arith.constant 0 : index
    %c36 = arith.constant 36 : index
    %18 = vector.load %arg1[%c0_19, %c0_20, %c36] : memref<2x8x512xf32, #tpu.memory_space<vmem>>, vector<1x8x384xf32>
    %19 = vector.shape_cast %18 : vector<1x8x384xf32> to vector<8x384xf32>
    %c48 = arith.constant 48 : index
    %c0_21 = arith.constant 0 : index
    %20 = vector.load %arg8[%c48, %c0_21] : memref<72x768xf32, #tpu.memory_space<vmem>>, vector<8x384xf32>
    tpu.vector_store %arg8[%c48, %c0_21], %19 {strides = array<i32>} : memref<72x768xf32, #tpu.memory_space<vmem>>, vector<8x384xf32>,
    %c0_22 = arith.constant 0 : index
    %c0_23 = arith.constant 0 : index
    %c37 = arith.constant 37 : index
    %21 = vector.load %arg1[%c0_22, %c0_23, %c37] : memref<2x8x512xf32, #tpu.memory_space<vmem>>, vector<1x8x384xf32>
    %22 = vector.shape_cast %21 : vector<1x8x384xf32> to vector<8x384xf32>
    %c56 = arith.constant 56 : index
    %c0_24 = arith.constant 0 : index
    %23 = vector.load %arg8[%c56, %c0_24] : memref<72x768xf32, #tpu.memory_space<vmem>>, vector<8x384xf32>
    tpu.vector_store %arg8[%c56, %c0_24], %22 {strides = array<i32>} : memref<72x768xf32, #tpu.memory_space<vmem>>, vector<8x384xf32>,
    %c0_25 = arith.constant 0 : index
    %c0_26 = arith.constant 0 : index
    %c38 = arith.constant 38 : index
    %24 = vector.load %arg1[%c0_25, %c0_26, %c38] : memref<2x8x512xf32, #tpu.memory_space<vmem>>, vector<1x8x384xf32>
    %25 = vector.shape_cast %24 : vector<1x8x384xf32> to vector<8x384xf32>
    %c64 = arith.constant 64 : index
    %c0_27 = arith.constant 0 : index
    %26 = vector.load %arg8[%c64, %c0_27] : memref<72x768xf32, #tpu.memory_space<vmem>>, vector<8x384xf32>
    tpu.vector_store %arg8[%c64, %c0_27], %25 {strides = array<i32>} : memref<72x768xf32, #tpu.memory_space<vmem>>, vector<8x384xf32>,
    %c1_28 = arith.constant 1 : index
    %c0_29 = arith.constant 0 : index
    %c0_30 = arith.constant 0 : index
    %27 = vector.load %arg1[%c1_28, %c0_29, %c0_30] : memref<2x8x512xf32, #tpu.memory_space<vmem>>, vector<1x8x384xf32>
    %28 = vector.shape_cast %27 : vector<1x8x384xf32> to vector<8x384xf32>
    %c0_31 = arith.constant 0 : index
    %c384 = arith.constant 384 : index
    %29 = vector.load %arg8[%c0_31, %c384] : memref<72x768xf32, #tpu.memory_space<vmem>>, vector<8x384xf32>
    tpu.vector_store %arg8[%c0_31, %c384], %28 {strides = array<i32>} : memref<72x768xf32, #tpu.memory_space<vmem>>, vector<8x384xf32>,
    %c1_32 = arith.constant 1 : index
    %c0_33 = arith.constant 0 : index
    %c1_34 = arith.constant 1 : index
    %30 = vector.load %arg1[%c1_32, %c0_33, %c1_34] : memref<2x8x512xf32, #tpu.memory_space<vmem>>, vector<1x8x384xf32>
    %31 = vector.shape_cast %30 : vector<1x8x384xf32> to vector<8x384xf32>
    %c8_35 = arith.constant 8 : index
    %c384_36 = arith.constant 384 : index
    %32 = vector.load %arg8[%c8_35, %c384_36] : memref<72x768xf32, #tpu.memory_space<vmem>>, vector<8x384xf32>
    tpu.vector_store %arg8[%c8_35, %c384_36], %31 {strides = array<i32>} : memref<72x768xf32, #tpu.memory_space<vmem>>, vector<8x384xf32>,
    %c1_37 = arith.constant 1 : index
    %c0_38 = arith.constant 0 : index
    %c2_39 = arith.constant 2 : index
    %33 = vector.load %arg1[%c1_37, %c0_38, %c2_39] : memref<2x8x512xf32, #tpu.memory_space<vmem>>, vector<1x8x384xf32>
    %34 = vector.shape_cast %33 : vector<1x8x384xf32> to vector<8x384xf32>
    %c16_40 = arith.constant 16 : index
    %c384_41 = arith.constant 384 : index
    %35 = vector.load %arg8[%c16_40, %c384_41] : memref<72x768xf32, #tpu.memory_space<vmem>>, vector<8x384xf32>
    tpu.vector_store %arg8[%c16_40, %c384_41], %34 {strides = array<i32>} : memref<72x768xf32, #tpu.memory_space<vmem>>, vector<8x384xf32>,
    %c1_42 = arith.constant 1 : index
    %c0_43 = arith.constant 0 : index
    %c18_44 = arith.constant 18 : index
    %36 = vector.load %arg1[%c1_42, %c0_43, %c18_44] : memref<2x8x512xf32, #tpu.memory_space<vmem>>, vector<1x8x384xf32>
    %37 = vector.shape_cast %36 : vector<1x8x384xf32> to vector<8x384xf32>
    %c24_45 = arith.constant 24 : index
    %c384_46 = arith.constant 384 : index
    %38 = vector.load %arg8[%c24_45, %c384_46] : memref<72x768xf32, #tpu.memory_space<vmem>>, vector<8x384xf32>
    tpu.vector_store %arg8[%c24_45, %c384_46], %37 {strides = array<i32>} : memref<72x768xf32, #tpu.memory_space<vmem>>, vector<8x384xf32>,
    %c1_47 = arith.constant 1 : index
    %c0_48 = arith.constant 0 : index
    %c19_49 = arith.constant 19 : index
    %39 = vector.load %arg1[%c1_47, %c0_48, %c19_49] : memref<2x8x512xf32, #tpu.memory_space<vmem>>, vector<1x8x384xf32>
    %40 = vector.shape_cast %39 : vector<1x8x384xf32> to vector<8x384xf32>
    %c32_50 = arith.constant 32 : index
    %c384_51 = arith.constant 384 : index
    %41 = vector.load %arg8[%c32_50, %c384_51] : memref<72x768xf32, #tpu.memory_space<vmem>>, vector<8x384xf32>
    tpu.vector_store %arg8[%c32_50, %c384_51], %40 {strides = array<i32>} : memref<72x768xf32, #tpu.memory_space<vmem>>, vector<8x384xf32>,
    %c1_52 = arith.constant 1 : index
    %c0_53 = arith.constant 0 : index
    %c20_54 = arith.constant 20 : index
    %42 = vector.load %arg1[%c1_52, %c0_53, %c20_54] : memref<2x8x512xf32, #tpu.memory_space<vmem>>, vector<1x8x384xf32>
    %43 = vector.shape_cast %42 : vector<1x8x384xf32> to vector<8x384xf32>
    %c40_55 = arith.constant 40 : index
    %c384_56 = arith.constant 384 : index
    %44 = vector.load %arg8[%c40_55, %c384_56] : memref<72x768xf32, #tpu.memory_space<vmem>>, vector<8x384xf32>
    tpu.vector_store %arg8[%c40_55, %c384_56], %43 {strides = array<i32>} : memref<72x768xf32, #tpu.memory_space<vmem>>, vector<8x384xf32>,
    %c1_57 = arith.constant 1 : index
    %c0_58 = arith.constant 0 : index
    %c36_59 = arith.constant 36 : index
    %45 = vector.load %arg1[%c1_57, %c0_58, %c36_59] : memref<2x8x512xf32, #tpu.memory_space<vmem>>, vector<1x8x384xf32>
    %46 = vector.shape_cast %45 : vector<1x8x384xf32> to vector<8x384xf32>
    %c48_60 = arith.constant 48 : index
    %c384_61 = arith.constant 384 : index
    %47 = vector.load %arg8[%c48_60, %c384_61] : memref<72x768xf32, #tpu.memory_space<vmem>>, vector<8x384xf32>
    tpu.vector_store %arg8[%c48_60, %c384_61], %46 {strides = array<i32>} : memref<72x768xf32, #tpu.memory_space<vmem>>, vector<8x384xf32>,
    %c1_62 = arith.constant 1 : index
    %c0_63 = arith.constant 0 : index
    %c37_64 = arith.constant 37 : index
    %48 = vector.load %arg1[%c1_62, %c0_63, %c37_64] : memref<2x8x512xf32, #tpu.memory_space<vmem>>, vector<1x8x384xf32>
    %49 = vector.shape_cast %48 : vector<1x8x384xf32> to vector<8x384xf32>
    %c56_65 = arith.constant 56 : index
    %c384_66 = arith.constant 384 : index
    %50 = vector.load %arg8[%c56_65, %c384_66] : memref<72x768xf32, #tpu.memory_space<vmem>>, vector<8x384xf32>
    tpu.vector_store %arg8[%c56_65, %c384_66], %49 {strides = array<i32>} : memref<72x768xf32, #tpu.memory_space<vmem>>, vector<8x384xf32>,
    %c1_67 = arith.constant 1 : index
    %c0_68 = arith.constant 0 : index
    %c38_69 = arith.constant 38 : index
    %51 = vector.load %arg1[%c1_67, %c0_68, %c38_69] : memref<2x8x512xf32, #tpu.memory_space<vmem>>, vector<1x8x384xf32>
    %52 = vector.shape_cast %51 : vector<1x8x384xf32> to vector<8x384xf32>
    %c64_70 = arith.constant 64 : index
    %c384_71 = arith.constant 384 : index
    %53 = vector.load %arg8[%c64_70, %c384_71] : memref<72x768xf32, #tpu.memory_space<vmem>>, vector<8x384xf32>
    tpu.vector_store %arg8[%c64_70, %c384_71], %52 {strides = array<i32>} : memref<72x768xf32, #tpu.memory_space<vmem>>, vector<8x384xf32>,
    %c0_72 = arith.constant 0 : index
    %c0_73 = arith.constant 0 : index
    %54 = vector.load %arg3[%c0_72, %c0_73] : memref<8x72xf32, #tpu.memory_space<vmem>>, vector<8x72xf32>
    %c0_74 = arith.constant 0 : index
    %c0_75 = arith.constant 0 : index
    %55 = vector.load %arg8[%c0_74, %c0_75] : memref<72x768xf32, #tpu.memory_space<vmem>>, vector<72x768xf32>
    %cst = arith.constant dense<0.000000e+00> : vector<8x768xf32>
    %56 = tpu.matmul %54, %55, %cst {dimension_numbers = #tpu.dot_dimension_numbers<[1], [0], [0], [1], [0, 0, 1, 1], [], []>} : vector<8x72xf32>, vector<72x768xf32>, vector<8x768xf32> -> vector<8x768xf32>
    %c0_76 = arith.constant 0 : index
    %c0_77 = arith.constant 0 : index
    %57 = vector.load %arg4[%c0_76, %c0_77] : memref<8x1xf32, #tpu.memory_space<vmem>>, vector<8x1xf32>
    %58 = vector.broadcast %57 : vector<8x1xf32> to vector<8x768xf32>
    %59 = arith.addf %56, %58 : vector<8x768xf32>
    %cst_78 = arith.constant 0.000000e+00 : f32
    %60 = vector.broadcast %cst_78 : f32 to vector<8x768xf32>
    %61 = arith.maximumf %59, %60 : vector<8x768xf32>
    %c0_79 = arith.constant 0 : index
    %c0_80 = arith.constant 0 : index
    %62 = vector.load %arg2[%c0_79, %c0_80] : memref<1x768xf32, #tpu.memory_space<vmem>>, vector<1x768xf32>
    %63 = vector.broadcast %62 : vector<1x768xf32> to vector<8x768xf32>
    %64 = arith.mulf %61, %63 : vector<8x768xf32>
    %c0_81 = arith.constant 0 : index
    %c0_82 = arith.constant 0 : index
    %65 = vector.load %arg9[%c0_81, %c0_82] : memref<8x896xf32, #tpu.memory_space<vmem>>, vector<8x768xf32>
    tpu.vector_store %arg9[%c0_81, %c0_82], %64 {strides = array<i32>} : memref<8x896xf32, #tpu.memory_space<vmem>>, vector<8x768xf32>,
    %cst_83 = arith.constant 0.000000e+00 : f32
    %66 = vector.broadcast %cst_83 : f32 to vector<8x128xf32>
    %c0_84 = arith.constant 0 : index
    %c768 = arith.constant 768 : index
    %67 = vector.load %arg9[%c0_84, %c768] : memref<8x896xf32, #tpu.memory_space<vmem>>, vector<8x128xf32>
    tpu.vector_store %arg9[%c0_84, %c768], %66 {strides = array<i32>} : memref<8x896xf32, #tpu.memory_space<vmem>>, vector<8x128xf32>,
    %c0_85 = arith.constant 0 : index
    %c0_86 = arith.constant 0 : index
    %c0_87 = arith.constant 0 : index
    %68 = vector.load %arg5[%c0_85, %c0_86, %c0_87] : memref<4x24x8xf32, #tpu.memory_space<vmem>>, vector<1x24x8xf32>
    %69 = vector.shape_cast %68 : vector<1x24x8xf32> to vector<24x8xf32>
    %c0_88 = arith.constant 0 : index
    %c0_89 = arith.constant 0 : index
    %70 = vector.load %arg9[%c0_88, %c0_89] : memref<8x896xf32, #tpu.memory_space<vmem>>, vector<8x768xf32>
    %cst_90 = arith.constant dense<0.000000e+00> : vector<24x768xf32>
    %71 = tpu.matmul %69, %70, %cst_90 {dimension_numbers = #tpu.dot_dimension_numbers<[1], [0], [0], [1], [0, 0, 1, 1], [], []>} : vector<24x8xf32>, vector<8x768xf32>, vector<24x768xf32> -> vector<24x768xf32>
    %c1_91 = arith.constant 1 : index
    %c0_92 = arith.constant 0 : index
    %c0_93 = arith.constant 0 : index
    %72 = vector.load %arg5[%c1_91, %c0_92, %c0_93] : memref<4x24x8xf32, #tpu.memory_space<vmem>>, vector<1x24x8xf32>
    %73 = vector.shape_cast %72 : vector<1x24x8xf32> to vector<24x8xf32>
    %c0_94 = arith.constant 0 : index
    %c1_95 = arith.constant 1 : index
    %74 = vector.load %arg9[%c0_94, %c1_95] : memref<8x896xf32, #tpu.memory_space<vmem>>, vector<8x768xf32>
    %cst_96 = arith.constant dense<0.000000e+00> : vector<24x768xf32>
    %75 = tpu.matmul %73, %74, %cst_96 {dimension_numbers = #tpu.dot_dimension_numbers<[1], [0], [0], [1], [0, 0, 1, 1], [], []>} : vector<24x8xf32>, vector<8x768xf32>, vector<24x768xf32> -> vector<24x768xf32>
    %76 = arith.addf %71, %75 : vector<24x768xf32>
    %c2_97 = arith.constant 2 : index
    %c0_98 = arith.constant 0 : index
    %c0_99 = arith.constant 0 : index
    %77 = vector.load %arg5[%c2_97, %c0_98, %c0_99] : memref<4x24x8xf32, #tpu.memory_space<vmem>>, vector<1x24x8xf32>
    %78 = vector.shape_cast %77 : vector<1x24x8xf32> to vector<24x8xf32>
    %c0_100 = arith.constant 0 : index
    %c18_101 = arith.constant 18 : index
    %79 = vector.load %arg9[%c0_100, %c18_101] : memref<8x896xf32, #tpu.memory_space<vmem>>, vector<8x768xf32>
    %cst_102 = arith.constant dense<0.000000e+00> : vector<24x768xf32>
    %80 = tpu.matmul %78, %79, %cst_102 {dimension_numbers = #tpu.dot_dimension_numbers<[1], [0], [0], [1], [0, 0, 1, 1], [], []>} : vector<24x8xf32>, vector<8x768xf32>, vector<24x768xf32> -> vector<24x768xf32>
    %81 = arith.addf %76, %80 : vector<24x768xf32>
    %c3 = arith.constant 3 : index
    %c0_103 = arith.constant 0 : index
    %c0_104 = arith.constant 0 : index
    %82 = vector.load %arg5[%c3, %c0_103, %c0_104] : memref<4x24x8xf32, #tpu.memory_space<vmem>>, vector<1x24x8xf32>
    %83 = vector.shape_cast %82 : vector<1x24x8xf32> to vector<24x8xf32>
    %c0_105 = arith.constant 0 : index
    %c19_106 = arith.constant 19 : index
    %84 = vector.load %arg9[%c0_105, %c19_106] : memref<8x896xf32, #tpu.memory_space<vmem>>, vector<8x768xf32>
    %cst_107 = arith.constant dense<0.000000e+00> : vector<24x768xf32>
    %85 = tpu.matmul %83, %84, %cst_107 {dimension_numbers = #tpu.dot_dimension_numbers<[1], [0], [0], [1], [0, 0, 1, 1], [], []>} : vector<24x8xf32>, vector<8x768xf32>, vector<24x768xf32> -> vector<24x768xf32>
    %86 = arith.addf %81, %85 : vector<24x768xf32>
    %c0_108 = arith.constant 0 : index
    %c0_109 = arith.constant 0 : index
    %87 = vector.load %arg6[%c0_108, %c0_109] : memref<24x1xf32, #tpu.memory_space<vmem>>, vector<24x1xf32>
    %88 = vector.broadcast %87 : vector<24x1xf32> to vector<24x768xf32>
    %89 = arith.addf %86, %88 : vector<24x768xf32>
    %cst_110 = arith.constant 0.000000e+00 : f32
    %90 = vector.broadcast %cst_110 : f32 to vector<24x768xf32>
    %91 = arith.maximumf %89, %90 : vector<24x768xf32>
    %c0_111 = arith.constant 0 : index
    %c0_112 = arith.constant 0 : index
    %c0_113 = arith.constant 0 : index
    %92 = vector.load %arg7[%c0_111, %c0_112, %c0_113] : memref<1x24x768xf32, #tpu.memory_space<vmem>>, vector<1x24x768xf32>
    %93 = vector.shape_cast %92 : vector<1x24x768xf32> to vector<24x768xf32>
    %94 = vector.shape_cast %91 : vector<24x768xf32> to vector<1x24x768xf32>
    tpu.vector_store %arg7[%c0_111, %c0_112, %c0_113], %94 {strides = array<i32>} : memref<1x24x768xf32, #tpu.memory_space<vmem>>, vector<1x24x768xf32>,
    return
  }
  func.func @transform_0(%arg0: i32) -> (i32, i32, i32) {
    %c0_i32 = arith.constant 0 : i32
    %c0_i32_0 = arith.constant 0 : i32
    %c0_i32_1 = arith.constant 0 : i32
    return %arg0, %c0_i32, %c0_i32_0 : i32, i32, i32
  }
  func.func @transform_1(%arg0: i32) -> (i32, i32) {
    %c0_i32 = arith.constant 0 : i32
    %c0_i32_0 = arith.constant 0 : i32
    %c0_i32_1 = arith.constant 0 : i32
    return %c0_i32, %c0_i32_0 : i32, i32
  }
  func.func @transform_2(%arg0: i32) -> (i32, i32) {
    %c0_i32 = arith.constant 0 : i32
    %c0_i32_0 = arith.constant 0 : i32
    %c0_i32_1 = arith.constant 0 : i32
    return %c0_i32, %c0_i32_0 : i32, i32
  }
  func.func @transform_3(%arg0: i32) -> (i32, i32) {
    %c0_i32 = arith.constant 0 : i32
    %c0_i32_0 = arith.constant 0 : i32
    %c0_i32_1 = arith.constant 0 : i32
    return %c0_i32, %c0_i32_0 : i32, i32
  }
  func.func @transform_4(%arg0: i32) -> (i32, i32, i32) {
    %c0_i32 = arith.constant 0 : i32
    %c0_i32_0 = arith.constant 0 : i32
    %c0_i32_1 = arith.constant 0 : i32
    %c0_i32_2 = arith.constant 0 : i32
    return %c0_i32, %c0_i32_0, %c0_i32_1 : i32, i32, i32
  }
  func.func @transform_5(%arg0: i32) -> (i32, i32) {
    %c0_i32 = arith.constant 0 : i32
    %c0_i32_0 = arith.constant 0 : i32
    %c0_i32_1 = arith.constant 0 : i32
    return %c0_i32, %c0_i32_0 : i32, i32
  }
  func.func @transform_6(%arg0: i32) -> (i32, i32, i32) {
    %c0_i32 = arith.constant 0 : i32
    %c0_i32_0 = arith.constant 0 : i32
    %c0_i32_1 = arith.constant 0 : i32
    return %arg0, %c0_i32, %c0_i32_0 : i32, i32, i32
  }
}

</mosaic_0001>

<llo_original>
// kernel: tile.18
$region0: #{tile.18}
  #allocation2 [shape = 's32[1]{0}', space=sflag, size = 0x4, scoped, tag = 'scoped memory for tile.18']
  %s0 = inlined_call_operand.hbm [shape: f32[6], index: 0, kind: input, shape index: {}]
  %s1 = inlined_call_operand.vmem [shape: f32[4,6], index: 1, kind: output, shape index: {}]
  $region1: #{tile.18} parent=0
    #allocation0 [shape = 'u8[512]{0}', space=vmem, size = 0x400, scoped, tag = 'operand span for operand 0']
    #allocation1 [shape = 's32[1]{0}', space=sflag, size = 0x4, scoped, tag = 'scoped memory for tile.18']
    %2 = vsyncpa [#allocation1], 0
    // Predicated region
    $region2: #{tile.18} parent=1 // pred_check
      _
    $region3: #{tile.18} parent=1 // pred_check_branch
      %4 = sbr.rel (0) target = $region5
    $region4: #{tile.18} parent=1 // pred_region
      %s6 = ssub.s32 16, 16
      %7 = vsyncadd [#allocation1], %s6
      %s9 = sshll.u32 [#allocation0], 4
      %s10 = int_to_ptr.vmem [resolvable:$true] %s9
      %12 = dma.hbm_to_vmem [thread:$0]  %s0, 16, %s10, [#allocation1]
    $region5: #{tile.18} parent=1 // pred_fallthru
      _
    // Predicated region
    $region6: #{tile.18} parent=1 // pred_check
      _
    $region7: #{tile.18} parent=1 // pred_check_branch
      %14 = sbr.rel (0) target = $region9
    $region8: #{tile.18} parent=1 // pred_region
      %15 = dma.done [#allocation1], 16
    $region9: #{tile.18} parent=1 // pred_fallthru
      _
    %v16 = vld [vmem:[#allocation0] ss:$0 sm:$0xff]
    %17 = vst [vmem:[%s1] sm:$0xf] %v16
    %18 = vsyncpa [#allocation1], 1

// kernel: decoder_block_forward.1
$region0: #{decoder_block_forward.1}
  #allocation0 [shape = 'u32[]', space=smem, size = 0x4, offset = 0x4, fixed_abs, tag = 'smem constant byte address 0x4 - core index']
  #allocation1 [shape = 'u32[144,128]{1,0:T(1,128)}', space=vmem, size = 0x12000, scoped, tag = 'internal scratch']
  #allocation2 [shape = 'f32[72,768]{1,0:T(8,128)}', space=vmem, size = 0x36000, scoped, tag = 'scratch operand']
  #allocation3 [shape = 'f32[8,896]{1,0:T(8,128)}', space=vmem, size = 0x7000, scoped, tag = 'scratch operand']
  %s0 = inlined_call_operand.vmem [shape: f32[2,8,512], index: 0, kind: input, shape index: {}]
  %s1 = inlined_call_operand.vmem [shape: f32[1,768], index: 1, kind: input, shape index: {}]
  %s2 = inlined_call_operand.vmem [shape: f32[8,72], index: 2, kind: input, shape index: {}]
  %s3 = inlined_call_operand.vmem [shape: f32[8,1], index: 3, kind: input, shape index: {}]
  %s4 = inlined_call_operand.vmem [shape: f32[4,24,8], index: 4, kind: input, shape index: {}]
  %s5 = inlined_call_operand.vmem [shape: f32[24,1], index: 5, kind: input, shape index: {}]
  %s6 = inlined_call_operand.vmem [shape: f32[1,24,768], index: 6, kind: output, shape index: {}]
  %s7 = sld [smem:[#allocation0]]
  $region34: #{decoder_block_forward.1} parent=0
    _
  %s9 = ssub.s32 1, %s7
  %s10 = scalar_select 0, %s9, %s7
  // Predicated region
  $region2: #{decoder_block_forward.1} parent=0 // pred_check
    _
  $region3: #{decoder_block_forward.1} parent=0 // pred_check_branch
    %12 = sbr.rel (0) target = $region5
  $region4: #{decoder_block_forward.1} parent=0 // pred_region
    _
  $region5: #{decoder_block_forward.1} parent=0 // pred_fallthru
    _
  // Predicated region
  $region6: #{decoder_block_forward.1} parent=0 // pred_check
    _
  $region7: #{decoder_block_forward.1} parent=0 // pred_check_branch
    %14 = sbr.rel (0) target = $region9
  $region8: #{decoder_block_forward.1} parent=0 // pred_region
    _
  $region9: #{decoder_block_forward.1} parent=0 // pred_fallthru
    _
  // Predicated region
  $region10: #{decoder_block_forward.1} parent=0 // pred_check
    _
  $region11: #{decoder_block_forward.1} parent=0 // pred_check_branch
    %16 = sbr.rel (0) target = $region13
  $region12: #{decoder_block_forward.1} parent=0 // pred_region
    _
  $region13: #{decoder_block_forward.1} parent=0 // pred_fallthru
    _
  // Predicated region
  $region14: #{decoder_block_forward.1} parent=0 // pred_check
    _
  $region15: #{decoder_block_forward.1} parent=0 // pred_check_branch
    %18 = sbr.rel (0) target = $region17
  $region16: #{decoder_block_forward.1} parent=0 // pred_region
    _
  $region17: #{decoder_block_forward.1} parent=0 // pred_fallthru
    _
  // Predicated region
  $region18: #{decoder_block_forward.1} parent=0 // pred_check
    _
  $region19: #{decoder_block_forward.1} parent=0 // pred_check_branch
    %20 = sbr.rel (0) target = $region21
  $region20: #{decoder_block_forward.1} parent=0 // pred_region
    _
  $region21: #{decoder_block_forward.1} parent=0 // pred_fallthru
    _
  // Predicated region
  $region22: #{decoder_block_forward.1} parent=0 // pred_check
    _
  $region23: #{decoder_block_forward.1} parent=0 // pred_check_branch
    %22 = sbr.rel (0) target = $region25
  $region24: #{decoder_block_forward.1} parent=0 // pred_region
    _
  $region25: #{decoder_block_forward.1} parent=0 // pred_fallthru
    _
  %v23 = vld [vmem:[%s0] sm:$0xff]
  %v24 = vld [vmem:[%s0 + $0x8] sm:$0xff]
  %v25 = vld [vmem:[%s0 + $0x10] sm:$0xff]
  %26 = vst [vmem:[#allocation2] sm:$0xff] %v23
  %27 = vst [vmem:[#allocation2 + $0x8] sm:$0xff] %v24
  %28 = vst [vmem:[#allocation2 + $0x10] sm:$0xff] %v25
  %v29 = vld [vmem:[%s0] sm:$0xff]
  %v30 = vld [vmem:[%s0 + $0x8] sm:$0xff]
  %v31 = vld [vmem:[%s0 + $0x10] sm:$0xff]
  %v32 = vld [vmem:[%s0 + $0x18] sm:$0xff]
  %37 = vrot.lane.b32.xlu0 %v29, 127
  %v38 = vpop.permute.xlu0 %37
  %39 = vrot.lane.b32.xlu0 %v30, 127
  %v40 = vpop.permute.xlu0 %39
  %41 = vrot.lane.b32.xlu0 %v31, 127
  %v42 = vpop.permute.xlu0 %41
  %43 = vrot.lane.b32.xlu0 %v32, 127
  %v44 = vpop.permute.xlu0 %43
  %vm45 = vcmask 1039360
  %v46 = vsel %vm45, %v38, %v40
  %v47 = vsel %vm45, %v40, %v42
  %v48 = vsel %vm45, %v42, %v44
  %52 = vst [vmem:[#allocation2 + $0x30] sm:$0xff] %v46
  %53 = vst [vmem:[#allocation2 + $0x38] sm:$0xff] %v47
  %54 = vst [vmem:[#allocation2 + $0x40] sm:$0xff] %v48
  %v55 = vld [vmem:[%s0] sm:$0xff]
  %v56 = vld [vmem:[%s0 + $0x8] sm:$0xff]
  %v57 = vld [vmem:[%s0 + $0x10] sm:$0xff]
  %v58 = vld [vmem:[%s0 + $0x18] sm:$0xff]
  %63 = vrot.lane.b32.xlu0 %v55, 126
  %v64 = vpop.permute.xlu0 %63
  %65 = vrot.lane.b32.xlu0 %v56, 126
  %v66 = vpop.permute.xlu0 %65
  %67 = vrot.lane.b32.xlu0 %v57, 126
  %v68 = vpop.permute.xlu0 %67
  %69 = vrot.lane.b32.xlu0 %v58, 126
  %v70 = vpop.permute.xlu0 %69
  %vm71 = vcmask 1031168
  %v72 = vsel %vm71, %v64, %v66
  %v73 = vsel %vm71, %v66, %v68
  %v74 = vsel %vm71, %v68, %v70
  %78 = vst [vmem:[#allocation2 + $0x60] sm:$0xff] %v72
  %79 = vst [vmem:[#allocation2 + $0x68] sm:$0xff] %v73
  %80 = vst [vmem:[#allocation2 + $0x70] sm:$0xff] %v74
  %v81 = vld [vmem:[%s0] sm:$0xff]
  %v82 = vld [vmem:[%s0 + $0x8] sm:$0xff]
  %v83 = vld [vmem:[%s0 + $0x10] sm:$0xff]
  %v84 = vld [vmem:[%s0 + $0x18] sm:$0xff]
  %89 = vrot.lane.b32.xlu0 %v81, 110
  %v90 = vpop.permute.xlu0 %89
  %91 = vrot.lane.b32.xlu0 %v82, 110
  %v92 = vpop.permute.xlu0 %91
  %93 = vrot.lane.b32.xlu0 %v83, 110
  %v94 = vpop.permute.xlu0 %93
  %95 = vrot.lane.b32.xlu0 %v84, 110
  %v96 = vpop.permute.xlu0 %95
  %vm97 = vcmask 900096
  %v98 = vsel %vm97, %v90, %v92
  %v99 = vsel %vm97, %v92, %v94
  %v100 = vsel %vm97, %v94, %v96
  %104 = vst [vmem:[#allocation2 + $0x90] sm:$0xff] %v98
  %105 = vst [vmem:[#allocation2 + $0x98] sm:$0xff] %v99
  %106 = vst [vmem:[#allocation2 + $0xa0] sm:$0xff] %v100
  %v107 = vld [vmem:[%s0] sm:$0xff]
  %v108 = vld [vmem:[%s0 + $0x8] sm:$0xff]
  %v109 = vld [vmem:[%s0 + $0x10] sm:$0xff]
  %v110 = vld [vmem:[%s0 + $0x18] sm:$0xff]
  %115 = vrot.lane.b32.xlu0 %v107, 109
  %v116 = vpop.permute.xlu0 %115
  %117 = vrot.lane.b32.xlu0 %v108, 109
  %v118 = vpop.permute.xlu0 %117
  %119 = vrot.lane.b32.xlu0 %v109, 109
  %v120 = vpop.permute.xlu0 %119
  %121 = vrot.lane.b32.xlu0 %v110, 109
  %v122 = vpop.permute.xlu0 %121
  %vm123 = vcmask 891904
  %v124 = vsel %vm123, %v116, %v118
  %v125 = vsel %vm123, %v118, %v120
  %v126 = vsel %vm123, %v120, %v122
  %130 = vst [vmem:[#allocation2 + $0xc0] sm:$0xff] %v124
  %131 = vst [vmem:[#allocation2 + $0xc8] sm:$0xff] %v125
  %132 = vst [vmem:[#allocation2 + $0xd0] sm:$0xff] %v126
  %v133 = vld [vmem:[%s0] sm:$0xff]
  %v134 = vld [vmem:[%s0 + $0x8] sm:$0xff]
  %v135 = vld [vmem:[%s0 + $0x10] sm:$0xff]
  %v136 = vld [vmem:[%s0 + $0x18] sm:$0xff]
  %141 = vrot.lane.b32.xlu0 %v133, 108
  %v142 = vpop.permute.xlu0 %141
  %143 = vrot.lane.b32.xlu0 %v134, 108
  %v144 = vpop.permute.xlu0 %143
  %145 = vrot.lane.b32.xlu0 %v135, 108
  %v146 = vpop.permute.xlu0 %145
  %147 = vrot.lane.b32.xlu0 %v136, 108
  %v148 = vpop.permute.xlu0 %147
  %vm149 = vcmask 883712
  %v150 = vsel %vm149, %v142, %v144
  %v151 = vsel %vm149, %v144, %v146
  %v152 = vsel %vm149, %v146, %v148
  %156 = vst [vmem:[#allocation2 + $0xf0] sm:$0xff] %v150
  %157 = vst [vmem:[#allocation2 + $0xf8] sm:$0xff] %v151
  %158 = vst [vmem:[#allocation2 + $0x100] sm:$0xff] %v152
  %v159 = vld [vmem:[%s0] sm:$0xff]
  %v160 = vld [vmem:[%s0 + $0x8] sm:$0xff]
  %v161 = vld [vmem:[%s0 + $0x10] sm:$0xff]
  %v162 = vld [vmem:[%s0 + $0x18] sm:$0xff]
  %167 = vrot.lane.b32.xlu0 %v159, 92
  %v168 = vpop.permute.xlu0 %167
  %169 = vrot.lane.b32.xlu0 %v160, 92
  %v170 = vpop.permute.xlu0 %169
  %171 = vrot.lane.b32.xlu0 %v161, 92
  %v172 = vpop.permute.xlu0 %171
  %173 = vrot.lane.b32.xlu0 %v162, 92
  %v174 = vpop.permute.xlu0 %173
  %vm175 = vcmask 752640
  %v176 = vsel %vm175, %v168, %v170
  %v177 = vsel %vm175, %v170, %v172
  %v178 = vsel %vm175, %v172, %v174
  %182 = vst [vmem:[#allocation2 + $0x120] sm:$0xff] %v176
  %183 = vst [vmem:[#allocation2 + $0x128] sm:$0xff] %v177
  %184 = vst [vmem:[#allocation2 + $0x130] sm:$0xff] %v178
  %v185 = vld [vmem:[%s0] sm:$0xff]
  %v186 = vld [vmem:[%s0 + $0x8] sm:$0xff]
  %v187 = vld [vmem:[%s0 + $0x10] sm:$0xff]
  %v188 = vld [vmem:[%s0 + $0x18] sm:$0xff]
  %193 = vrot.lane.b32.xlu0 %v185, 91
  %v194 = vpop.permute.xlu0 %193
  %195 = vrot.lane.b32.xlu0 %v186, 91
  %v196 = vpop.permute.xlu0 %195
  %197 = vrot.lane.b32.xlu0 %v187, 91
  %v198 = vpop.permute.xlu0 %197
  %199 = vrot.lane.b32.xlu0 %v188, 91
  %v200 = vpop.permute.xlu0 %199
  %vm201 = vcmask 744448
  %v202 = vsel %vm201, %v194, %v196
  %v203 = vsel %vm201, %v196, %v198
  %v204 = vsel %vm201, %v198, %v200
  %208 = vst [vmem:[#allocation2 + $0x150] sm:$0xff] %v202
  %209 = vst [vmem:[#allocation2 + $0x158] sm:$0xff] %v203
  %210 = vst [vmem:[#allocation2 + $0x160] sm:$0xff] %v204
  %v211 = vld [vmem:[%s0] sm:$0xff]
  %v212 = vld [vmem:[%s0 + $0x8] sm:$0xff]
  %v213 = vld [vmem:[%s0 + $0x10] sm:$0xff]
  %v214 = vld [vmem:[%s0 + $0x18] sm:$0xff]
  %219 = vrot.lane.b32.xlu0 %v211, 90
  %v220 = vpop.permute.xlu0 %219
  %221 = vrot.lane.b32.xlu0 %v212, 90
  %v222 = vpop.permute.xlu0 %221
  %223 = vrot.lane.b32.xlu0 %v213, 90
  %v224 = vpop.permute.xlu0 %223
  %225 = vrot.lane.b32.xlu0 %v214, 90
  %v226 = vpop.permute.xlu0 %225
  %vm227 = vcmask 736256
  %v228 = vsel %vm227, %v220, %v222
  %v229 = vsel %vm227, %v222, %v224
  %v230 = vsel %vm227, %v224, %v226
  %234 = vst [vmem:[#allocation2 + $0x180] sm:$0xff] %v228
  %235 = vst [vmem:[#allocation2 + $0x188] sm:$0xff] %v229
  %236 = vst [vmem:[#allocation2 + $0x190] sm:$0xff] %v230
  %s237 = scalar_lea.vmem %s0, 32
  %v238 = vld [vmem:[%s237] sm:$0xff]
  %v239 = vld [vmem:[%s237 + $0x8] sm:$0xff]
  %v240 = vld [vmem:[%s237 + $0x10] sm:$0xff]
  %241 = vst [vmem:[#allocation2 + $0x18] sm:$0xff] %v238
  %242 = vst [vmem:[#allocation2 + $0x20] sm:$0xff] %v239
  %243 = vst [vmem:[#allocation2 + $0x28] sm:$0xff] %v240
  %v244 = vld [vmem:[%s237] sm:$0xff]
  %v245 = vld [vmem:[%s237 + $0x8] sm:$0xff]
  %v246 = vld [vmem:[%s237 + $0x10] sm:$0xff]
  %v247 = vld [vmem:[%s237 + $0x18] sm:$0xff]
  %252 = vrot.lane.b32.xlu0 %v244, 127
  %v253 = vpop.permute.xlu0 %252
  %254 = vrot.lane.b32.xlu0 %v245, 127
  %v255 = vpop.permute.xlu0 %254
  %256 = vrot.lane.b32.xlu0 %v246, 127
  %v257 = vpop.permute.xlu0 %256
  %258 = vrot.lane.b32.xlu0 %v247, 127
  %v259 = vpop.permute.xlu0 %258
  %v260 = vsel %vm45, %v253, %v255
  %v261 = vsel %vm45, %v255, %v257
  %v262 = vsel %vm45, %v257, %v259
  %266 = vst [vmem:[#allocation2 + $0x48] sm:$0xff] %v260
  %267 = vst [vmem:[#allocation2 + $0x50] sm:$0xff] %v261
  %268 = vst [vmem:[#allocation2 + $0x58] sm:$0xff] %v262
  %v269 = vld [vmem:[%s237] sm:$0xff]
  %v270 = vld [vmem:[%s237 + $0x8] sm:$0xff]
  %v271 = vld [vmem:[%s237 + $0x10] sm:$0xff]
  %v272 = vld [vmem:[%s237 + $0x18] sm:$0xff]
  %277 = vrot.lane.b32.xlu0 %v269, 126
  %v278 = vpop.permute.xlu0 %277
  %279 = vrot.lane.b32.xlu0 %v270, 126
  %v280 = vpop.permute.xlu0 %279
  %281 = vrot.lane.b32.xlu0 %v271, 126
  %v282 = vpop.permute.xlu0 %281
  %283 = vrot.lane.b32.xlu0 %v272, 126
  %v284 = vpop.permute.xlu0 %283
  %v285 = vsel %vm71, %v278, %v280
  %v286 = vsel %vm71, %v280, %v282
  %v287 = vsel %vm71, %v282, %v284
  %291 = vst [vmem:[#allocation2 + $0x78] sm:$0xff] %v285
  %292 = vst [vmem:[#allocation2 + $0x80] sm:$0xff] %v286
  %293 = vst [vmem:[#allocation2 + $0x88] sm:$0xff] %v287
  %v294 = vld [vmem:[%s237] sm:$0xff]
  %v295 = vld [vmem:[%s237 + $0x8] sm:$0xff]
  %v296 = vld [vmem:[%s237 + $0x10] sm:$0xff]
  %v297 = vld [vmem:[%s237 + $0x18] sm:$0xff]
  %302 = vrot.lane.b32.xlu0 %v294, 110
  %v303 = vpop.permute.xlu0 %302
  %304 = vrot.lane.b32.xlu0 %v295, 110
  %v305 = vpop.permute.xlu0 %304
  %306 = vrot.lane.b32.xlu0 %v296, 110
  %v307 = vpop.permute.xlu0 %306
  %308 = vrot.lane.b32.xlu0 %v297, 110
  %v309 = vpop.permute.xlu0 %308
  %v310 = vsel %vm97, %v303, %v305
  %v311 = vsel %vm97, %v305, %v307
  %v312 = vsel %vm97, %v307, %v309
  %316 = vst [vmem:[#allocation2 + $0xa8] sm:$0xff] %v310
  %317 = vst [vmem:[#allocation2 + $0xb0] sm:$0xff] %v311
  %318 = vst [vmem:[#allocation2 + $0xb8] sm:$0xff] %v312
  %v319 = vld [vmem:[%s237] sm:$0xff]
  %v320 = vld [vmem:[%s237 + $0x8] sm:$0xff]
  %v321 = vld [vmem:[%s237 + $0x10] sm:$0xff]
  %v322 = vld [vmem:[%s237 + $0x18] sm:$0xff]
  %327 = vrot.lane.b32.xlu0 %v319, 109
  %v328 = vpop.permute.xlu0 %327
  %329 = vrot.lane.b32.xlu0 %v320, 109
  %v330 = vpop.permute.xlu0 %329
  %331 = vrot.lane.b32.xlu0 %v321, 109
  %v332 = vpop.permute.xlu0 %331
  %333 = vrot.lane.b32.xlu0 %v322, 109
  %v334 = vpop.permute.xlu0 %333
  %v335 = vsel %vm123, %v328, %v330
  %v336 = vsel %vm123, %v330, %v332
  %v337 = vsel %vm123, %v332, %v334
  %341 = vst [vmem:[#allocation2 + $0xd8] sm:$0xff] %v335
  %342 = vst [vmem:[#allocation2 + $0xe0] sm:$0xff] %v336
  %343 = vst [vmem:[#allocation2 + $0xe8] sm:$0xff] %v337
  %v344 = vld [vmem:[%s237] sm:$0xff]
  %v345 = vld [vmem:[%s237 + $0x8] sm:$0xff]
  %v346 = vld [vmem:[%s237 + $0x10] sm:$0xff]
  %v347 = vld [vmem:[%s237 + $0x18] sm:$0xff]
  %352 = vrot.lane.b32.xlu0 %v344, 108
  %v353 = vpop.permute.xlu0 %352
  %354 = vrot.lane.b32.xlu0 %v345, 108
  %v355 = vpop.permute.xlu0 %354
  %356 = vrot.lane.b32.xlu0 %v346, 108
  %v357 = vpop.permute.xlu0 %356
  %358 = vrot.lane.b32.xlu0 %v347, 108
  %v359 = vpop.permute.xlu0 %358
  %v360 = vsel %vm149, %v353, %v355
  %v361 = vsel %vm149, %v355, %v357
  %v362 = vsel %vm149, %v357, %v359
  %366 = vst [vmem:[#allocation2 + $0x108] sm:$0xff] %v360
  %367 = vst [vmem:[#allocation2 + $0x110] sm:$0xff] %v361
  %368 = vst [vmem:[#allocation2 + $0x118] sm:$0xff] %v362
  %v369 = vld [vmem:[%s237] sm:$0xff]
  %v370 = vld [vmem:[%s237 + $0x8] sm:$0xff]
  %v371 = vld [vmem:[%s237 + $0x10] sm:$0xff]
  %v372 = vld [vmem:[%s237 + $0x18] sm:$0xff]
  %377 = vrot.lane.b32.xlu0 %v369, 92
  %v378 = vpop.permute.xlu0 %377
  %379 = vrot.lane.b32.xlu0 %v370, 92
  %v380 = vpop.permute.xlu0 %379
  %381 = vrot.lane.b32.xlu0 %v371, 92
  %v382 = vpop.permute.xlu0 %381
  %383 = vrot.lane.b32.xlu0 %v372, 92
  %v384 = vpop.permute.xlu0 %383
  %v385 = vsel %vm175, %v378, %v380
  %v386 = vsel %vm175, %v380, %v382
  %v387 = vsel %vm175, %v382, %v384
  %391 = vst [vmem:[#allocation2 + $0x138] sm:$0xff] %v385
  %392 = vst [vmem:[#allocation2 + $0x140] sm:$0xff] %v386
  %393 = vst [vmem:[#allocation2 + $0x148] sm:$0xff] %v387
  %v394 = vld [vmem:[%s237] sm:$0xff]
  %v395 = vld [vmem:[%s237 + $0x8] sm:$0xff]
  %v396 = vld [vmem:[%s237 + $0x10] sm:$0xff]
  %v397 = vld [vmem:[%s237 + $0x18] sm:$0xff]
  %402 = vrot.lane.b32.xlu0 %v394, 91
  %v403 = vpop.permute.xlu0 %402
  %404 = vrot.lane.b32.xlu0 %v395, 91
  %v405 = vpop.permute.xlu0 %404
  %406 = vrot.lane.b32.xlu0 %v396, 91
  %v407 = vpop.permute.xlu0 %406
  %408 = vrot.lane.b32.xlu0 %v397, 91
  %v409 = vpop.permute.xlu0 %408
  %v410 = vsel %vm201, %v403, %v405
  %v411 = vsel %vm201, %v405, %v407
  %v412 = vsel %vm201, %v407, %v409
  %416 = vst [vmem:[#allocation2 + $0x168] sm:$0xff] %v410
  %417 = vst [vmem:[#allocation2 + $0x170] sm:$0xff] %v411
  %418 = vst [vmem:[#allocation2 + $0x178] sm:$0xff] %v412
  %v419 = vld [vmem:[%s237] sm:$0xff]
  %v420 = vld [vmem:[%s237 + $0x8] sm:$0xff]
  %v421 = vld [vmem:[%s237 + $0x10] sm:$0xff]
  %v422 = vld [vmem:[%s237 + $0x18] sm:$0xff]
  %427 = vrot.lane.b32.xlu0 %v419, 90
  %v428 = vpop.permute.xlu0 %427
  %429 = vrot.lane.b32.xlu0 %v420, 90
  %v430 = vpop.permute.xlu0 %429
  %431 = vrot.lane.b32.xlu0 %v421, 90
  %v432 = vpop.permute.xlu0 %431
  %433 = vrot.lane.b32.xlu0 %v422, 90
  %v434 = vpop.permute.xlu0 %433
  %v435 = vsel %vm227, %v428, %v430
  %v436 = vsel %vm227, %v430, %v432
  %v437 = vsel %vm227, %v432, %v434
  %441 = vst [vmem:[#allocation2 + $0x198] sm:$0xff] %v435
  %442 = vst [vmem:[#allocation2 + $0x1a0] sm:$0xff] %v436
  %443 = vst [vmem:[#allocation2 + $0x1a8] sm:$0xff] %v437
  %v444 = vld [vmem:[%s2] sm:$0xff]
  %v445 = vld [vmem:[#allocation2] sm:$0xff]
  %v446 = vld [vmem:[#allocation2 + $0x8] sm:$0xff]
  %v447 = vld [vmem:[#allocation2 + $0x10] sm:$0xff]
  %v448 = vld [vmem:[#allocation2 + $0x18] sm:$0xff]
  %v449 = vld [vmem:[#allocation2 + $0x20] sm:$0xff]
  %v450 = vld [vmem:[#allocation2 + $0x28] sm:$0xff]
  %v451 = vld [vmem:[#allocation2 + $0x30] sm:$0xff]
  %v452 = vld [vmem:[#allocation2 + $0x38] sm:$0xff]
  %v453 = vld [vmem:[#allocation2 + $0x40] sm:$0xff]
  %v454 = vld [vmem:[#allocation2 + $0x48] sm:$0xff]
  %v455 = vld [vmem:[#allocation2 + $0x50] sm:$0xff]
  %v456 = vld [vmem:[#allocation2 + $0x58] sm:$0xff]
  %v457 = vld [vmem:[#allocation2 + $0x60] sm:$0xff]
  %v458 = vld [vmem:[#allocation2 + $0x68] sm:$0xff]
  %v459 = vld [vmem:[#allocation2 + $0x70] sm:$0xff]
  %v460 = vld [vmem:[#allocation2 + $0x78] sm:$0xff]
  %v461 = vld [vmem:[#allocation2 + $0x80] sm:$0xff]
  %v462 = vld [vmem:[#allocation2 + $0x88] sm:$0xff]
  %v463 = vld [vmem:[#allocation2 + $0x90] sm:$0xff]
  %v464 = vld [vmem:[#allocation2 + $0x98] sm:$0xff]
  %v465 = vld [vmem:[#allocation2 + $0xa0] sm:$0xff]
  %v466 = vld [vmem:[#allocation2 + $0xa8] sm:$0xff]
  %v467 = vld [vmem:[#allocation2 + $0xb0] sm:$0xff]
  %v468 = vld [vmem:[#allocation2 + $0xb8] sm:$0xff]
  %v469 = vld [vmem:[#allocation2 + $0xc0] sm:$0xff]
  %v470 = vld [vmem:[#allocation2 + $0xc8] sm:$0xff]
  %v471 = vld [vmem:[#allocation2 + $0xd0] sm:$0xff]
  %v472 = vld [vmem:[#allocation2 + $0xd8] sm:$0xff]
  %v473 = vld [vmem:[#allocation2 + $0xe0] sm:$0xff]
  %v474 = vld [vmem:[#allocation2 + $0xe8] sm:$0xff]
  %v475 = vld [vmem:[#allocation2 + $0xf0] sm:$0xff]
  %v476 = vld [vmem:[#allocation2 + $0xf8] sm:$0xff]
  %v477 = vld [vmem:[#allocation2 + $0x100] sm:$0xff]
  %v478 = vld [vmem:[#allocation2 + $0x108] sm:$0xff]
  %v479 = vld [vmem:[#allocation2 + $0x110] sm:$0xff]
  %v480 = vld [vmem:[#allocation2 + $0x118] sm:$0xff]
  %v481 = vld [vmem:[#allocation2 + $0x120] sm:$0xff]
  %v482 = vld [vmem:[#allocation2 + $0x128] sm:$0xff]
  %v483 = vld [vmem:[#allocation2 + $0x130] sm:$0xff]
  %v484 = vld [vmem:[#allocation2 + $0x138] sm:$0xff]
  %v485 = vld [vmem:[#allocation2 + $0x140] sm:$0xff]
  %v486 = vld [vmem:[#allocation2 + $0x148] sm:$0xff]
  %v487 = vld [vmem:[#allocation2 + $0x150] sm:$0xff]
  %v488 = vld [vmem:[#allocation2 + $0x158] sm:$0xff]
  %v489 = vld [vmem:[#allocation2 + $0x160] sm:$0xff]
  %v490 = vld [vmem:[#allocation2 + $0x168] sm:$0xff]
  %v491 = vld [vmem:[#allocation2 + $0x170] sm:$0xff]
  %v492 = vld [vmem:[#allocation2 + $0x178] sm:$0xff]
  %v493 = vld [vmem:[#allocation2 + $0x180] sm:$0xff]
  %v494 = vld [vmem:[#allocation2 + $0x188] sm:$0xff]
  %v495 = vld [vmem:[#allocation2 + $0x190] sm:$0xff]
  %v496 = vld [vmem:[#allocation2 + $0x198] sm:$0xff]
  %v497 = vld [vmem:[#allocation2 + $0x1a0] sm:$0xff]
  %v498 = vld [vmem:[#allocation2 + $0x1a8] sm:$0xff]
  %v499 = vld [vmem:[%s3] sm:$0xff]
  %501 = vset.pattern.permute.xlu0 0
  %502 = vperm.xlu0 %501, %v499
  %v503 = vpop.permute.xlu0 %502
  %vm505 = vcmask 588800
  %v507 = vsel %vm505, %v444, 0
  %509 = vmatprep.subr.mxu0 %v446
  %510 = vmatpush1.msra.mxu0 %v445
  %511 = vmatprep.subr.mxu0 %v452
  %512 = vmatpush1.msra.mxu0 %v451
  %513 = vmatprep.subr.mxu0 %v458
  %514 = vmatpush1.msra.mxu0 %v457
  %515 = vmatprep.subr.mxu0 %v464
  %516 = vmatpush1.msra.mxu0 %v463
  %517 = vmatprep.subr.mxu0 %v470
  %518 = vmatpush1.msra.mxu0 %v469
  %519 = vmatprep.subr.mxu0 %v476
  %520 = vmatpush1.msra.mxu0 %v475
  %521 = vmatprep.subr.mxu0 %v482
  %522 = vmatpush1.msra.mxu0 %v481
  %523 = vmatprep.subr.mxu0 %v488
  %524 = vmatpush1.msra.mxu0 %v487
  %525 = vmatprep.subr.mxu0 %v494
  %526 = vmatpush1.msra.mxu0 %v493
  %527 = vmatprep.subr.mxu0 0.0
  %528 = vmatpush1.msra.mxu0 0.0
  %529 = vmatprep.subr.mxu0 0.0
  %530 = vmatpush1.msra.mxu0 0.0
  %531 = vmatprep.subr.mxu0 0.0
  %532 = vmatpush1.msra.mxu0 0.0
  %533 = vmatprep.subr.mxu0 0.0
  %534 = vmatpush1.msra.mxu0 0.0
  %535 = vmatprep.subr.mxu0 0.0
  %536 = vmatpush1.msra.mxu0 0.0
  %537 = vmatprep.subr.mxu0 0.0
  %538 = vmatpush1.msra.mxu0 0.0
  %539 = vmatprep.subr.mxu0 0.0
  %540 = vmatpush1.msra.mxu0 0.0
  %541 = vmatprep.subr.mxu0 0.0
  %542 = vmatpush1.msra.mxu0 0.0
  %543 = vmatprep.subr.mxu0 0.0
  %544 = vmatpush1.msra.mxu0 0.0
  %545 = vmatprep.subr.mxu0 0.0
  %546 = vmatpush1.msra.mxu0 0.0
  %547 = vmatprep.subr.mxu0 0.0
  %548 = vmatpush1.msra.mxu0 0.0
  %549 = vmatprep.subr.mxu0 0.0
  %550 = vmatpush1.msra.mxu0 0.0
  %551 = vmatprep.subr.mxu0 0.0
  %552 = vmatpush1.msra.mxu0 0.0
  %553 = vmatprep.subr.mxu0 0.0
  %554 = vmatpush1.msra.mxu0 0.0
  %555 = vmatprep.subr.mxu0 0.0
  %556 = vmatpush1.msra.mxu0 0.0
  %557 = vmatprep.subr.mxu0 0.0
  %558 = vmatpush1.msra.mxu0 0.0
  %559 = vmatprep.subr.mxu0 0.0
  %560 = vmatpush1.msra.mxu0 0.0
  %561 = vmatprep.subr.mxu0 0.0
  %562 = vmatpush1.msra.mxu0 0.0
  %563 = vmatprep.subr.mxu0 0.0
  %564 = vmatpush1.msra.mxu0 0.0
  %565 = vmatprep.subr.mxu0 0.0
  %566 = vmatpush1.msra.mxu0 0.0
  %567 = vmatprep.subr.mxu0 0.0
  %568 = vmatpush1.msra.mxu0 0.0
  %569 = vmatprep.subr.mxu0 0.0
  %570 = vmatpush1.msra.mxu0 0.0
  %571 = vmatprep.subr.mxu0 0.0
  %572 = vmatpush1.msra.mxu0 0.0
  %573 = vmatprep.mubr.f32.mxu0 0.0
  %574 = vmatmul.mubr.f32.gmra.mrb[0].mxu0 %v507
  %v575 = vpop.f32.mrb[0].mxu0
  %v576 = vadd.f32 %v503, %v575
  %v577 = vpop.f32.mrb[0].mxu0
  %v578 = vadd.f32 %v503, %v577
  %579 = vdwg.mxu0
  %580 = vmatprep.subr.mxu0 %v448
  %581 = vmatpush1.msra.mxu0 %v447
  %582 = vmatprep.subr.mxu0 %v454
  %583 = vmatpush1.msra.mxu0 %v453
  %584 = vmatprep.subr.mxu0 %v460
  %585 = vmatpush1.msra.mxu0 %v459
  %586 = vmatprep.subr.mxu0 %v466
  %587 = vmatpush1.msra.mxu0 %v465
  %588 = vmatprep.subr.mxu0 %v472
  %589 = vmatpush1.msra.mxu0 %v471
  %590 = vmatprep.subr.mxu0 %v478
  %591 = vmatpush1.msra.mxu0 %v477
  %592 = vmatprep.subr.mxu0 %v484
  %593 = vmatpush1.msra.mxu0 %v483
  %594 = vmatprep.subr.mxu0 %v490
  %595 = vmatpush1.msra.mxu0 %v489
  %596 = vmatprep.subr.mxu0 %v496
  %597 = vmatpush1.msra.mxu0 %v495
  %598 = vmatprep.subr.mxu0 0.0
  %599 = vmatpush1.msra.mxu0 0.0
  %600 = vmatprep.subr.mxu0 0.0
  %601 = vmatpush1.msra.mxu0 0.0
  %602 = vmatprep.subr.mxu0 0.0
  %603 = vmatpush1.msra.mxu0 0.0
  %604 = vmatprep.subr.mxu0 0.0
  %605 = vmatpush1.msra.mxu0 0.0
  %606 = vmatprep.subr.mxu0 0.0
  %607 = vmatpush1.msra.mxu0 0.0
  %608 = vmatprep.subr.mxu0 0.0
  %609 = vmatpush1.msra.mxu0 0.0
  %610 = vmatprep.subr.mxu0 0.0
  %611 = vmatpush1.msra.mxu0 0.0
  %612 = vmatprep.subr.mxu0 0.0
  %613 = vmatpush1.msra.mxu0 0.0
  %614 = vmatprep.subr.mxu0 0.0
  %615 = vmatpush1.msra.mxu0 0.0
  %616 = vmatprep.subr.mxu0 0.0
  %617 = vmatpush1.msra.mxu0 0.0
  %618 = vmatprep.subr.mxu0 0.0
  %619 = vmatpush1.msra.mxu0 0.0
  %620 = vmatprep.subr.mxu0 0.0
  %621 = vmatpush1.msra.mxu0 0.0
  %622 = vmatprep.subr.mxu0 0.0
  %623 = vmatpush1.msra.mxu0 0.0
  %624 = vmatprep.subr.mxu0 0.0
  %625 = vmatpush1.msra.mxu0 0.0
  %626 = vmatprep.subr.mxu0 0.0
  %627 = vmatpush1.msra.mxu0 0.0
  %628 = vmatprep.subr.mxu0 0.0
  %629 = vmatpush1.msra.mxu0 0.0
  %630 = vmatprep.subr.mxu0 0.0
  %631 = vmatpush1.msra.mxu0 0.0
  %632 = vmatprep.subr.mxu0 0.0
  %633 = vmatpush1.msra.mxu0 0.0
  %634 = vmatprep.subr.mxu0 0.0
  %635 = vmatpush1.msra.mxu0 0.0
  %636 = vmatprep.subr.mxu0 0.0
  %637 = vmatpush1.msra.mxu0 0.0
  %638 = vmatprep.subr.mxu0 0.0
  %639 = vmatpush1.msra.mxu0 0.0
  %640 = vmatprep.subr.mxu0 0.0
  %641 = vmatpush1.msra.mxu0 0.0
  %642 = vmatprep.subr.mxu0 0.0
  %643 = vmatpush1.msra.mxu0 0.0
  %644 = vmatprep.mubr.f32.mxu0 0.0
  %645 = vmatmul.mubr.f32.gmra.mrb[0].mxu0 %v507
  %v646 = vpop.f32.mrb[0].mxu0
  %v647 = vadd.f32 %v503, %v646
  %v648 = vpop.f32.mrb[0].mxu0
  %v649 = vadd.f32 %v503, %v648
  %650 = vdwg.mxu0
  %651 = vmatprep.subr.mxu0 %v450
  %652 = vmatpush1.msra.mxu0 %v449
  %653 = vmatprep.subr.mxu0 %v456
  %654 = vmatpush1.msra.mxu0 %v455
  %655 = vmatprep.subr.mxu0 %v462
  %656 = vmatpush1.msra.mxu0 %v461
  %657 = vmatprep.subr.mxu0 %v468
  %658 = vmatpush1.msra.mxu0 %v467
  %659 = vmatprep.subr.mxu0 %v474
  %660 = vmatpush1.msra.mxu0 %v473
  %661 = vmatprep.subr.mxu0 %v480
  %662 = vmatpush1.msra.mxu0 %v479
  %663 = vmatprep.subr.mxu0 %v486
  %664 = vmatpush1.msra.mxu0 %v485
  %665 = vmatprep.subr.mxu0 %v492
  %666 = vmatpush1.msra.mxu0 %v491
  %667 = vmatprep.subr.mxu0 %v498
  %668 = vmatpush1.msra.mxu0 %v497
  %669 = vmatprep.subr.mxu0 0.0
  %670 = vmatpush1.msra.mxu0 0.0
  %671 = vmatprep.subr.mxu0 0.0
  %672 = vmatpush1.msra.mxu0 0.0
  %673 = vmatprep.subr.mxu0 0.0
  %674 = vmatpush1.msra.mxu0 0.0
  %675 = vmatprep.subr.mxu0 0.0
  %676 = vmatpush1.msra.mxu0 0.0
  %677 = vmatprep.subr.mxu0 0.0
  %678 = vmatpush1.msra.mxu0 0.0
  %679 = vmatprep.subr.mxu0 0.0
  %680 = vmatpush1.msra.mxu0 0.0
  %681 = vmatprep.subr.mxu0 0.0
  %682 = vmatpush1.msra.mxu0 0.0
  %683 = vmatprep.subr.mxu0 0.0
  %684 = vmatpush1.msra.mxu0 0.0
  %685 = vmatprep.subr.mxu0 0.0
  %686 = vmatpush1.msra.mxu0 0.0
  %687 = vmatprep.subr.mxu0 0.0
  %688 = vmatpush1.msra.mxu0 0.0
  %689 = vmatprep.subr.mxu0 0.0
  %690 = vmatpush1.msra.mxu0 0.0
  %691 = vmatprep.subr.mxu0 0.0
  %692 = vmatpush1.msra.mxu0 0.0
  %693 = vmatprep.subr.mxu0 0.0
  %694 = vmatpush1.msra.mxu0 0.0
  %695 = vmatprep.subr.mxu0 0.0
  %696 = vmatpush1.msra.mxu0 0.0
  %697 = vmatprep.subr.mxu0 0.0
  %698 = vmatpush1.msra.mxu0 0.0
  %699 = vmatprep.subr.mxu0 0.0
  %700 = vmatpush1.msra.mxu0 0.0
  %701 = vmatprep.subr.mxu0 0.0
  %702 = vmatpush1.msra.mxu0 0.0
  %703 = vmatprep.subr.mxu0 0.0
  %704 = vmatpush1.msra.mxu0 0.0
  %705 = vmatprep.subr.mxu0 0.0
  %706 = vmatpush1.msra.mxu0 0.0
  %707 = vmatprep.subr.mxu0 0.0
  %708 = vmatpush1.msra.mxu0 0.0
  %709 = vmatprep.subr.mxu0 0.0
  %710 = vmatpush1.msra.mxu0 0.0
  %711 = vmatprep.subr.mxu0 0.0
  %712 = vmatpush1.msra.mxu0 0.0
  %713 = vmatprep.subr.mxu0 0.0
  %714 = vmatpush1.msra.mxu0 0.0
  %715 = vmatprep.mubr.f32.mxu0 0.0
  %716 = vmatmul.mubr.f32.gmra.mrb[0].mxu0 %v507
  %v717 = vpop.f32.mrb[0].mxu0
  %v718 = vadd.f32 %v503, %v717
  %v719 = vpop.f32.mrb[0].mxu0
  %v720 = vadd.f32 %v503, %v719
  %721 = vdwg.mxu0
  %v722 = vmax.f32 %v576, 0.0
  %v723 = vmax.f32 %v578, 0.0
  %v724 = vmax.f32 %v647, 0.0
  %v725 = vmax.f32 %v649, 0.0
  %v726 = vmax.f32 %v718, 0.0
  %v727 = vmax.f32 %v720, 0.0
  %v728 = vld [vmem:[%s1] sm:$0x3f]
  %v730 = vlaneseq
  %v731 = vshrl.u32 %v730, 7
  %v732 = vsub.s32 0, %v731
  %v733 = vrot.slane %v728, %v732
  %v734 = vlaneseq
  %v735 = vshrl.u32 %v734, 7
  %v736 = vsub.s32 1, %v735
  %v737 = vrot.slane %v728, %v736
  %v738 = vlaneseq
  %v739 = vshrl.u32 %v738, 7
  %v740 = vsub.s32 2, %v739
  %v741 = vrot.slane %v728, %v740
  %v742 = vlaneseq
  %v743 = vshrl.u32 %v742, 7
  %v744 = vsub.s32 3, %v743
  %v745 = vrot.slane %v728, %v744
  %v746 = vlaneseq
  %v747 = vshrl.u32 %v746, 7
  %v748 = vsub.s32 4, %v747
  %v749 = vrot.slane %v728, %v748
  %v750 = vlaneseq
  %v751 = vshrl.u32 %v750, 7
  %v752 = vsub.s32 5, %v751
  %v753 = vrot.slane %v728, %v752
  %v760 = vmul.f32 %v722, %v733
  %v761 = vmul.f32 %v723, %v737
  %v762 = vmul.f32 %v724, %v741
  %v763 = vmul.f32 %v725, %v745
  %v764 = vmul.f32 %v726, %v749
  %v765 = vmul.f32 %v727, %v753
  %766 = vst [vmem:[#allocation3] sm:$0xff] %v760
  %767 = vst [vmem:[#allocation3 + $0x8] sm:$0xff] %v761
  %768 = vst [vmem:[#allocation3 + $0x10] sm:$0xff] %v762
  %769 = vst [vmem:[#allocation3 + $0x18] sm:$0xff] %v763
  %770 = vst [vmem:[#allocation3 + $0x20] sm:$0xff] %v764
  %771 = vst [vmem:[#allocation3 + $0x28] sm:$0xff] %v765
  %772 = vst [vmem:[#allocation3 + $0x30] sm:$0xff] 0.0
  %v773 = vld [vmem:[%s4] sm:$0xff]
  %v774 = vld [vmem:[%s4 + $0x8] sm:$0xff]
  %v775 = vld [vmem:[%s4 + $0x10] sm:$0xff]
  %v776 = vld [vmem:[#allocation3] sm:$0xff]
  %v777 = vld [vmem:[#allocation3 + $0x8] sm:$0xff]
  %v778 = vld [vmem:[#allocation3 + $0x10] sm:$0xff]
  %v779 = vld [vmem:[#allocation3 + $0x18] sm:$0xff]
  %v780 = vld [vmem:[#allocation3 + $0x20] sm:$0xff]
  %v781 = vld [vmem:[#allocation3 + $0x28] sm:$0xff]
  %s782 = scalar_lea.vmem %s4, 24
  %v783 = vld [vmem:[%s782] sm:$0xff]
  %v784 = vld [vmem:[%s782 + $0x8] sm:$0xff]
  %v785 = vld [vmem:[%s782 + $0x10] sm:$0xff]
  %v786 = vld [vmem:[#allocation3] sm:$0xff]
  %v787 = vld [vmem:[#allocation3 + $0x8] sm:$0xff]
  %v788 = vld [vmem:[#allocation3 + $0x10] sm:$0xff]
  %v789 = vld [vmem:[#allocation3 + $0x18] sm:$0xff]
  %v790 = vld [vmem:[#allocation3 + $0x20] sm:$0xff]
  %v791 = vld [vmem:[#allocation3 + $0x28] sm:$0xff]
  %v792 = vld [vmem:[#allocation3 + $0x30] sm:$0xff]
  %800 = vrot.lane.b32.xlu0 %v786, 127
  %v801 = vpop.permute.xlu0 %800
  %802 = vrot.lane.b32.xlu0 %v787, 127
  %v803 = vpop.permute.xlu0 %802
  %804 = vrot.lane.b32.xlu0 %v788, 127
  %v805 = vpop.permute.xlu0 %804
  %806 = vrot.lane.b32.xlu0 %v789, 127
  %v807 = vpop.permute.xlu0 %806
  %808 = vrot.lane.b32.xlu0 %v790, 127
  %v809 = vpop.permute.xlu0 %808
  %810 = vrot.lane.b32.xlu0 %v791, 127
  %v811 = vpop.permute.xlu0 %810
  %812 = vrot.lane.b32.xlu0 %v792, 127
  %v813 = vpop.permute.xlu0 %812
  %v814 = vsel %vm45, %v801, %v803
  %v815 = vsel %vm45, %v803, %v805
  %v816 = vsel %vm45, %v805, %v807
  %v817 = vsel %vm45, %v807, %v809
  %v818 = vsel %vm45, %v809, %v811
  %v819 = vsel %vm45, %v811, %v813
  %vm826 = vcmask 64512
  %v828 = vsel %vm826, %v783, 0
  %v831 = vsel %vm826, %v784, 0
  %v834 = vsel %vm826, %v785, 0
  %836 = vmatprep.subr.mxu0 %v815
  %837 = vmatpush1.msra.mxu0 %v814
  %838 = vmatprep.subr.mxu0 0.0
  %839 = vmatpush1.msra.mxu0 0.0
  %840 = vmatprep.subr.mxu0 0.0
  %841 = vmatpush1.msra.mxu0 0.0
  %842 = vmatprep.subr.mxu0 0.0
  %843 = vmatpush1.msra.mxu0 0.0
  %844 = vmatprep.subr.mxu0 0.0
  %845 = vmatpush1.msra.mxu0 0.0
  %846 = vmatprep.subr.mxu0 0.0
  %847 = vmatpush1.msra.mxu0 0.0
  %848 = vmatprep.subr.mxu0 0.0
  %849 = vmatpush1.msra.mxu0 0.0
  %850 = vmatprep.subr.mxu0 0.0
  %851 = vmatpush1.msra.mxu0 0.0
  %852 = vmatprep.subr.mxu0 0.0
  %853 = vmatpush1.msra.mxu0 0.0
  %854 = vmatprep.subr.mxu0 0.0
  %855 = vmatpush1.msra.mxu0 0.0
  %856 = vmatprep.subr.mxu0 0.0
  %857 = vmatpush1.msra.mxu0 0.0
  %858 = vmatprep.subr.mxu0 0.0
  %859 = vmatpush1.msra.mxu0 0.0
  %860 = vmatprep.subr.mxu0 0.0
  %861 = vmatpush1.msra.mxu0 0.0
  %862 = vmatprep.subr.mxu0 0.0
  %863 = vmatpush1.msra.mxu0 0.0
  %864 = vmatprep.subr.mxu0 0.0
  %865 = vmatpush1.msra.mxu0 0.0
  %866 = vmatprep.subr.mxu0 0.0
  %867 = vmatpush1.msra.mxu0 0.0
  %868 = vmatprep.subr.mxu0 0.0
  %869 = vmatpush1.msra.mxu0 0.0
  %870 = vmatprep.subr.mxu0 0.0
  %871 = vmatpush1.msra.mxu0 0.0
  %872 = vmatprep.subr.mxu0 0.0
  %873 = vmatpush1.msra.mxu0 0.0
  %874 = vmatprep.subr.mxu0 0.0
  %875 = vmatpush1.msra.mxu0 0.0
  %876 = vmatprep.subr.mxu0 0.0
  %877 = vmatpush1.msra.mxu0 0.0
  %878 = vmatprep.subr.mxu0 0.0
  %879 = vmatpush1.msra.mxu0 0.0
  %880 = vmatprep.subr.mxu0 0.0
  %881 = vmatpush1.msra.mxu0 0.0
  %882 = vmatprep.subr.mxu0 0.0
  %883 = vmatpush1.msra.mxu0 0.0
  %884 = vmatprep.subr.mxu0 0.0
  %885 = vmatpush1.msra.mxu0 0.0
  %886 = vmatprep.subr.mxu0 0.0
  %887 = vmatpush1.msra.mxu0 0.0
  %888 = vmatprep.subr.mxu0 0.0
  %889 = vmatpush1.msra.mxu0 0.0
  %890 = vmatprep.subr.mxu0 0.0
  %891 = vmatpush1.msra.mxu0 0.0
  %892 = vmatprep.subr.mxu0 0.0
  %893 = vmatpush1.msra.mxu0 0.0
  %894 = vmatprep.subr.mxu0 0.0
  %895 = vmatpush1.msra.mxu0 0.0
  %896 = vmatprep.subr.mxu0 0.0
  %897 = vmatpush1.msra.mxu0 0.0
  %898 = vmatprep.subr.mxu0 0.0
  %899 = vmatpush1.msra.mxu0 0.0
  %900 = vmatprep.mubr.f32.mxu0 0.0
  %901 = vmatmul.mubr.f32.gmra.mrb[0].mxu0 %v828
  %v902 = vpop.f32.mrb[0].mxu0
  %v903 = vadd.f32 0.0, %v902
  %v904 = vpop.f32.mrb[0].mxu0
  %v905 = vadd.f32 0.0, %v904
  %906 = vmatprep.mubr.f32.mxu0 0.0
  %907 = vmatmul.mubr.f32.gmra.mrb[0].mxu0 %v831
  %v908 = vpop.f32.mrb[0].mxu0
  %v909 = vadd.f32 0.0, %v908
  %v910 = vpop.f32.mrb[0].mxu0
  %v911 = vadd.f32 0.0, %v910
  %912 = vmatprep.mubr.f32.mxu0 0.0
  %913 = vmatmul.mubr.f32.gmra.mrb[0].mxu0 %v834
  %v914 = vpop.f32.mrb[0].mxu0
  %v915 = vadd.f32 0.0, %v914
  %v916 = vpop.f32.mrb[0].mxu0
  %v917 = vadd.f32 0.0, %v916
  %918 = vdwg.mxu0
  %919 = vmatprep.subr.mxu0 %v817
  %920 = vmatpush1.msra.mxu0 %v816
  %921 = vmatprep.subr.mxu0 0.0
  %922 = vmatpush1.msra.mxu0 0.0
  %923 = vmatprep.subr.mxu0 0.0
  %924 = vmatpush1.msra.mxu0 0.0
  %925 = vmatprep.subr.mxu0 0.0
  %926 = vmatpush1.msra.mxu0 0.0
  %927 = vmatprep.subr.mxu0 0.0
  %928 = vmatpush1.msra.mxu0 0.0
  %929 = vmatprep.subr.mxu0 0.0
  %930 = vmatpush1.msra.mxu0 0.0
  %931 = vmatprep.subr.mxu0 0.0
  %932 = vmatpush1.msra.mxu0 0.0
  %933 = vmatprep.subr.mxu0 0.0
  %934 = vmatpush1.msra.mxu0 0.0
  %935 = vmatprep.subr.mxu0 0.0
  %936 = vmatpush1.msra.mxu0 0.0
  %937 = vmatprep.subr.mxu0 0.0
  %938 = vmatpush1.msra.mxu0 0.0
  %939 = vmatprep.subr.mxu0 0.0
  %940 = vmatpush1.msra.mxu0 0.0
  %941 = vmatprep.subr.mxu0 0.0
  %942 = vmatpush1.msra.mxu0 0.0
  %943 = vmatprep.subr.mxu0 0.0
  %944 = vmatpush1.msra.mxu0 0.0
  %945 = vmatprep.subr.mxu0 0.0
  %946 = vmatpush1.msra.mxu0 0.0
  %947 = vmatprep.subr.mxu0 0.0
  %948 = vmatpush1.msra.mxu0 0.0
  %949 = vmatprep.subr.mxu0 0.0
  %950 = vmatpush1.msra.mxu0 0.0
  %951 = vmatprep.subr.mxu0 0.0
  %952 = vmatpush1.msra.mxu0 0.0
  %953 = vmatprep.subr.mxu0 0.0
  %954 = vmatpush1.msra.mxu0 0.0
  %955 = vmatprep.subr.mxu0 0.0
  %956 = vmatpush1.msra.mxu0 0.0
  %957 = vmatprep.subr.mxu0 0.0
  %958 = vmatpush1.msra.mxu0 0.0
  %959 = vmatprep.subr.mxu0 0.0
  %960 = vmatpush1.msra.mxu0 0.0
  %961 = vmatprep.subr.mxu0 0.0
  %962 = vmatpush1.msra.mxu0 0.0
  %963 = vmatprep.subr.mxu0 0.0
  %964 = vmatpush1.msra.mxu0 0.0
  %965 = vmatprep.subr.mxu0 0.0
  %966 = vmatpush1.msra.mxu0 0.0
  %967 = vmatprep.subr.mxu0 0.0
  %968 = vmatpush1.msra.mxu0 0.0
  %969 = vmatprep.subr.mxu0 0.0
  %970 = vmatpush1.msra.mxu0 0.0
  %971 = vmatprep.subr.mxu0 0.0
  %972 = vmatpush1.msra.mxu0 0.0
  %973 = vmatprep.subr.mxu0 0.0
  %974 = vmatpush1.msra.mxu0 0.0
  %975 = vmatprep.subr.mxu0 0.0
  %976 = vmatpush1.msra.mxu0 0.0
  %977 = vmatprep.subr.mxu0 0.0
  %978 = vmatpush1.msra.mxu0 0.0
  %979 = vmatprep.subr.mxu0 0.0
  %980 = vmatpush1.msra.mxu0 0.0
  %981 = vmatprep.subr.mxu0 0.0
  %982 = vmatpush1.msra.mxu0 0.0
  %983 = vmatprep.mubr.f32.mxu0 0.0
  %984 = vmatmul.mubr.f32.gmra.mrb[0].mxu0 %v828
  %v985 = vpop.f32.mrb[0].mxu0
  %v986 = vadd.f32 0.0, %v985
  %v987 = vpop.f32.mrb[0].mxu0
  %v988 = vadd.f32 0.0, %v987
  %989 = vmatprep.mubr.f32.mxu0 0.0
  %990 = vmatmul.mubr.f32.gmra.mrb[0].mxu0 %v831
  %v991 = vpop.f32.mrb[0].mxu0
  %v992 = vadd.f32 0.0, %v991
  %v993 = vpop.f32.mrb[0].mxu0
  %v994 = vadd.f32 0.0, %v993
  %995 = vmatprep.mubr.f32.mxu0 0.0
  %996 = vmatmul.mubr.f32.gmra.mrb[0].mxu0 %v834
  %v997 = vpop.f32.mrb[0].mxu0
  %v998 = vadd.f32 0.0, %v997
  %v999 = vpop.f32.mrb[0].mxu0
  %v1000 = vadd.f32 0.0, %v999
  %1001 = vdwg.mxu0
  %1002 = vmatprep.subr.mxu0 %v819
  %1003 = vmatpush1.msra.mxu0 %v818
  %1004 = vmatprep.subr.mxu0 0.0
  %1005 = vmatpush1.msra.mxu0 0.0
  %1006 = vmatprep.subr.mxu0 0.0
  %1007 = vmatpush1.msra.mxu0 0.0
  %1008 = vmatprep.subr.mxu0 0.0
  %1009 = vmatpush1.msra.mxu0 0.0
  %1010 = vmatprep.subr.mxu0 0.0
  %1011 = vmatpush1.msra.mxu0 0.0
  %1012 = vmatprep.subr.mxu0 0.0
  %1013 = vmatpush1.msra.mxu0 0.0
  %1014 = vmatprep.subr.mxu0 0.0
  %1015 = vmatpush1.msra.mxu0 0.0
  %1016 = vmatprep.subr.mxu0 0.0
  %1017 = vmatpush1.msra.mxu0 0.0
  %1018 = vmatprep.subr.mxu0 0.0
  %1019 = vmatpush1.msra.mxu0 0.0
  %1020 = vmatprep.subr.mxu0 0.0
  %1021 = vmatpush1.msra.mxu0 0.0
  %1022 = vmatprep.subr.mxu0 0.0
  %1023 = vmatpush1.msra.mxu0 0.0
  %1024 = vmatprep.subr.mxu0 0.0
  %1025 = vmatpush1.msra.mxu0 0.0
  %1026 = vmatprep.subr.mxu0 0.0
  %1027 = vmatpush1.msra.mxu0 0.0
  %1028 = vmatprep.subr.mxu0 0.0
  %1029 = vmatpush1.msra.mxu0 0.0
  %1030 = vmatprep.subr.mxu0 0.0
  %1031 = vmatpush1.msra.mxu0 0.0
  %1032 = vmatprep.subr.mxu0 0.0
  %1033 = vmatpush1.msra.mxu0 0.0
  %1034 = vmatprep.subr.mxu0 0.0
  %1035 = vmatpush1.msra.mxu0 0.0
  %1036 = vmatprep.subr.mxu0 0.0
  %1037 = vmatpush1.msra.mxu0 0.0
  %1038 = vmatprep.subr.mxu0 0.0
  %1039 = vmatpush1.msra.mxu0 0.0
  %1040 = vmatprep.subr.mxu0 0.0
  %1041 = vmatpush1.msra.mxu0 0.0
  %1042 = vmatprep.subr.mxu0 0.0
  %1043 = vmatpush1.msra.mxu0 0.0
  %1044 = vmatprep.subr.mxu0 0.0
  %1045 = vmatpush1.msra.mxu0 0.0
  %1046 = vmatprep.subr.mxu0 0.0
  %1047 = vmatpush1.msra.mxu0 0.0
  %1048 = vmatprep.subr.mxu0 0.0
  %1049 = vmatpush1.msra.mxu0 0.0
  %1050 = vmatprep.subr.mxu0 0.0
  %1051 = vmatpush1.msra.mxu0 0.0
  %1052 = vmatprep.subr.mxu0 0.0
  %1053 = vmatpush1.msra.mxu0 0.0
  %1054 = vmatprep.subr.mxu0 0.0
  %1055 = vmatpush1.msra.mxu0 0.0
  %1056 = vmatprep.subr.mxu0 0.0
  %1057 = vmatpush1.msra.mxu0 0.0
  %1058 = vmatprep.subr.mxu0 0.0
  %1059 = vmatpush1.msra.mxu0 0.0
  %1060 = vmatprep.subr.mxu0 0.0
  %1061 = vmatpush1.msra.mxu0 0.0
  %1062 = vmatprep.subr.mxu0 0.0
  %1063 = vmatpush1.msra.mxu0 0.0
  %1064 = vmatprep.subr.mxu0 0.0
  %1065 = vmatpush1.msra.mxu0 0.0
  %1066 = vmatprep.mubr.f32.mxu0 0.0
  %1067 = vmatmul.mubr.f32.gmra.mrb[0].mxu0 %v828
  %v1068 = vpop.f32.mrb[0].mxu0
  %v1069 = vadd.f32 0.0, %v1068
  %v1070 = vpop.f32.mrb[0].mxu0
  %v1071 = vadd.f32 0.0, %v1070
  %1072 = vmatprep.mubr.f32.mxu0 0.0
  %1073 = vmatmul.mubr.f32.gmra.mrb[0].mxu0 %v831
  %v1074 = vpop.f32.mrb[0].mxu0
  %v1075 = vadd.f32 0.0, %v1074
  %v1076 = vpop.f32.mrb[0].mxu0
  %v1077 = vadd.f32 0.0, %v1076
  %1078 = vmatprep.mubr.f32.mxu0 0.0
  %1079 = vmatmul.mubr.f32.gmra.mrb[0].mxu0 %v834
  %v1080 = vpop.f32.mrb[0].mxu0
  %v1081 = vadd.f32 0.0, %v1080
  %v1082 = vpop.f32.mrb[0].mxu0
  %v1083 = vadd.f32 0.0, %v1082
  %1084 = vdwg.mxu0
  %v1086 = vsel %vm826, %v773, 0
  %v1089 = vsel %vm826, %v774, 0
  %v1092 = vsel %vm826, %v775, 0
  %1094 = vmatprep.subr.mxu0 %v777
  %1095 = vmatpush1.msra.mxu0 %v776
  %1096 = vmatprep.subr.mxu0 0.0
  %1097 = vmatpush1.msra.mxu0 0.0
  %1098 = vmatprep.subr.mxu0 0.0
  %1099 = vmatpush1.msra.mxu0 0.0
  %1100 = vmatprep.subr.mxu0 0.0
  %1101 = vmatpush1.msra.mxu0 0.0
  %1102 = vmatprep.subr.mxu0 0.0
  %1103 = vmatpush1.msra.mxu0 0.0
  %1104 = vmatprep.subr.mxu0 0.0
  %1105 = vmatpush1.msra.mxu0 0.0
  %1106 = vmatprep.subr.mxu0 0.0
  %1107 = vmatpush1.msra.mxu0 0.0
  %1108 = vmatprep.subr.mxu0 0.0
  %1109 = vmatpush1.msra.mxu0 0.0
  %1110 = vmatprep.subr.mxu0 0.0
  %1111 = vmatpush1.msra.mxu0 0.0
  %1112 = vmatprep.subr.mxu0 0.0
  %1113 = vmatpush1.msra.mxu0 0.0
  %1114 = vmatprep.subr.mxu0 0.0
  %1115 = vmatpush1.msra.mxu0 0.0
  %1116 = vmatprep.subr.mxu0 0.0
  %1117 = vmatpush1.msra.mxu0 0.0
  %1118 = vmatprep.subr.mxu0 0.0
  %1119 = vmatpush1.msra.mxu0 0.0
  %1120 = vmatprep.subr.mxu0 0.0
  %1121 = vmatpush1.msra.mxu0 0.0
  %1122 = vmatprep.subr.mxu0 0.0
  %1123 = vmatpush1.msra.mxu0 0.0
  %1124 = vmatprep.subr.mxu0 0.0
  %1125 = vmatpush1.msra.mxu0 0.0
  %1126 = vmatprep.subr.mxu0 0.0
  %1127 = vmatpush1.msra.mxu0 0.0
  %1128 = vmatprep.subr.mxu0 0.0
  %1129 = vmatpush1.msra.mxu0 0.0
  %1130 = vmatprep.subr.mxu0 0.0
  %1131 = vmatpush1.msra.mxu0 0.0
  %1132 = vmatprep.subr.mxu0 0.0
  %1133 = vmatpush1.msra.mxu0 0.0
  %1134 = vmatprep.subr.mxu0 0.0
  %1135 = vmatpush1.msra.mxu0 0.0
  %1136 = vmatprep.subr.mxu0 0.0
  %1137 = vmatpush1.msra.mxu0 0.0
  %1138 = vmatprep.subr.mxu0 0.0
  %1139 = vmatpush1.msra.mxu0 0.0
  %1140 = vmatprep.subr.mxu0 0.0
  %1141 = vmatpush1.msra.mxu0 0.0
  %1142 = vmatprep.subr.mxu0 0.0
  %1143 = vmatpush1.msra.mxu0 0.0
  %1144 = vmatprep.subr.mxu0 0.0
  %1145 = vmatpush1.msra.mxu0 0.0
  %1146 = vmatprep.subr.mxu0 0.0
  %1147 = vmatpush1.msra.mxu0 0.0
  %1148 = vmatprep.subr.mxu0 0.0
  %1149 = vmatpush1.msra.mxu0 0.0
  %1150 = vmatprep.subr.mxu0 0.0
  %1151 = vmatpush1.msra.mxu0 0.0
  %1152 = vmatprep.subr.mxu0 0.0
  %1153 = vmatpush1.msra.mxu0 0.0
  %1154 = vmatprep.subr.mxu0 0.0
  %1155 = vmatpush1.msra.mxu0 0.0
  %1156 = vmatprep.subr.mxu0 0.0
  %1157 = vmatpush1.msra.mxu0 0.0
  %1158 = vmatprep.mubr.f32.mxu0 0.0
  %1159 = vmatmul.mubr.f32.gmra.mrb[0].mxu0 %v1086
  %v1160 = vpop.f32.mrb[0].mxu0
  %v1161 = vadd.f32 %v903, %v1160
  %v1162 = vpop.f32.mrb[0].mxu0
  %v1163 = vadd.f32 %v905, %v1162
  %1164 = vmatprep.mubr.f32.mxu0 0.0
  %1165 = vmatmul.mubr.f32.gmra.mrb[0].mxu0 %v1089
  %v1166 = vpop.f32.mrb[0].mxu0
  %v1167 = vadd.f32 %v909, %v1166
  %v1168 = vpop.f32.mrb[0].mxu0
  %v1169 = vadd.f32 %v911, %v1168
  %1170 = vmatprep.mubr.f32.mxu0 0.0
  %1171 = vmatmul.mubr.f32.gmra.mrb[0].mxu0 %v1092
  %v1172 = vpop.f32.mrb[0].mxu0
  %v1173 = vadd.f32 %v915, %v1172
  %v1174 = vpop.f32.mrb[0].mxu0
  %v1175 = vadd.f32 %v917, %v1174
  %1176 = vdwg.mxu0
  %1177 = vmatprep.subr.mxu0 %v779
  %1178 = vmatpush1.msra.mxu0 %v778
  %1179 = vmatprep.subr.mxu0 0.0
  %1180 = vmatpush1.msra.mxu0 0.0
  %1181 = vmatprep.subr.mxu0 0.0
  %1182 = vmatpush1.msra.mxu0 0.0
  %1183 = vmatprep.subr.mxu0 0.0
  %1184 = vmatpush1.msra.mxu0 0.0
  %1185 = vmatprep.subr.mxu0 0.0
  %1186 = vmatpush1.msra.mxu0 0.0
  %1187 = vmatprep.subr.mxu0 0.0
  %1188 = vmatpush1.msra.mxu0 0.0
  %1189 = vmatprep.subr.mxu0 0.0
  %1190 = vmatpush1.msra.mxu0 0.0
  %1191 = vmatprep.subr.mxu0 0.0
  %1192 = vmatpush1.msra.mxu0 0.0
  %1193 = vmatprep.subr.mxu0 0.0
  %1194 = vmatpush1.msra.mxu0 0.0
  %1195 = vmatprep.subr.mxu0 0.0
  %1196 = vmatpush1.msra.mxu0 0.0
  %1197 = vmatprep.subr.mxu0 0.0
  %1198 = vmatpush1.msra.mxu0 0.0
  %1199 = vmatprep.subr.mxu0 0.0
  %1200 = vmatpush1.msra.mxu0 0.0
  %1201 = vmatprep.subr.mxu0 0.0
  %1202 = vmatpush1.msra.mxu0 0.0
  %1203 = vmatprep.subr.mxu0 0.0
  %1204 = vmatpush1.msra.mxu0 0.0
  %1205 = vmatprep.subr.mxu0 0.0
  %1206 = vmatpush1.msra.mxu0 0.0
  %1207 = vmatprep.subr.mxu0 0.0
  %1208 = vmatpush1.msra.mxu0 0.0
  %1209 = vmatprep.subr.mxu0 0.0
  %1210 = vmatpush1.msra.mxu0 0.0
  %1211 = vmatprep.subr.mxu0 0.0
  %1212 = vmatpush1.msra.mxu0 0.0
  %1213 = vmatprep.subr.mxu0 0.0
  %1214 = vmatpush1.msra.mxu0 0.0
  %1215 = vmatprep.subr.mxu0 0.0
  %1216 = vmatpush1.msra.mxu0 0.0
  %1217 = vmatprep.subr.mxu0 0.0
  %1218 = vmatpush1.msra.mxu0 0.0
  %1219 = vmatprep.subr.mxu0 0.0
  %1220 = vmatpush1.msra.mxu0 0.0
  %1221 = vmatprep.subr.mxu0 0.0
  %1222 = vmatpush1.msra.mxu0 0.0
  %1223 = vmatprep.subr.mxu0 0.0
  %1224 = vmatpush1.msra.mxu0 0.0
  %1225 = vmatprep.subr.mxu0 0.0
  %1226 = vmatpush1.msra.mxu0 0.0
  %1227 = vmatprep.subr.mxu0 0.0
  %1228 = vmatpush1.msra.mxu0 0.0
  %1229 = vmatprep.subr.mxu0 0.0
  %1230 = vmatpush1.msra.mxu0 0.0
  %1231 = vmatprep.subr.mxu0 0.0
  %1232 = vmatpush1.msra.mxu0 0.0
  %1233 = vmatprep.subr.mxu0 0.0
  %1234 = vmatpush1.msra.mxu0 0.0
  %1235 = vmatprep.subr.mxu0 0.0
  %1236 = vmatpush1.msra.mxu0 0.0
  %1237 = vmatprep.subr.mxu0 0.0
  %1238 = vmatpush1.msra.mxu0 0.0
  %1239 = vmatprep.subr.mxu0 0.0
  %1240 = vmatpush1.msra.mxu0 0.0
  %1241 = vmatprep.mubr.f32.mxu0 0.0
  %1242 = vmatmul.mubr.f32.gmra.mrb[0].mxu0 %v1086
  %v1243 = vpop.f32.mrb[0].mxu0
  %v1244 = vadd.f32 %v986, %v1243
  %v1245 = vpop.f32.mrb[0].mxu0
  %v1246 = vadd.f32 %v988, %v1245
  %1247 = vmatprep.mubr.f32.mxu0 0.0
  %1248 = vmatmul.mubr.f32.gmra.mrb[0].mxu0 %v1089
  %v1249 = vpop.f32.mrb[0].mxu0
  %v1250 = vadd.f32 %v992, %v1249
  %v1251 = vpop.f32.mrb[0].mxu0
  %v1252 = vadd.f32 %v994, %v1251
  %1253 = vmatprep.mubr.f32.mxu0 0.0
  %1254 = vmatmul.mubr.f32.gmra.mrb[0].mxu0 %v1092
  %v1255 = vpop.f32.mrb[0].mxu0
  %v1256 = vadd.f32 %v998, %v1255
  %v1257 = vpop.f32.mrb[0].mxu0
  %v1258 = vadd.f32 %v1000, %v1257
  %1259 = vdwg.mxu0
  %1260 = vmatprep.subr.mxu0 %v781
  %1261 = vmatpush1.msra.mxu0 %v780
  %1262 = vmatprep.subr.mxu0 0.0
  %1263 = vmatpush1.msra.mxu0 0.0
  %1264 = vmatprep.subr.mxu0 0.0
  %1265 = vmatpush1.msra.mxu0 0.0
  %1266 = vmatprep.subr.mxu0 0.0
  %1267 = vmatpush1.msra.mxu0 0.0
  %1268 = vmatprep.subr.mxu0 0.0
  %1269 = vmatpush1.msra.mxu0 0.0
  %1270 = vmatprep.subr.mxu0 0.0
  %1271 = vmatpush1.msra.mxu0 0.0
  %1272 = vmatprep.subr.mxu0 0.0
  %1273 = vmatpush1.msra.mxu0 0.0
  %1274 = vmatprep.subr.mxu0 0.0
  %1275 = vmatpush1.msra.mxu0 0.0
  %1276 = vmatprep.subr.mxu0 0.0
  %1277 = vmatpush1.msra.mxu0 0.0
  %1278 = vmatprep.subr.mxu0 0.0
  %1279 = vmatpush1.msra.mxu0 0.0
  %1280 = vmatprep.subr.mxu0 0.0
  %1281 = vmatpush1.msra.mxu0 0.0
  %1282 = vmatprep.subr.mxu0 0.0
  %1283 = vmatpush1.msra.mxu0 0.0
  %1284 = vmatprep.subr.mxu0 0.0
  %1285 = vmatpush1.msra.mxu0 0.0
  %1286 = vmatprep.subr.mxu0 0.0
  %1287 = vmatpush1.msra.mxu0 0.0
  %1288 = vmatprep.subr.mxu0 0.0
  %1289 = vmatpush1.msra.mxu0 0.0
  %1290 = vmatprep.subr.mxu0 0.0
  %1291 = vmatpush1.msra.mxu0 0.0
  %1292 = vmatprep.subr.mxu0 0.0
  %1293 = vmatpush1.msra.mxu0 0.0
  %1294 = vmatprep.subr.mxu0 0.0
  %1295 = vmatpush1.msra.mxu0 0.0
  %1296 = vmatprep.subr.mxu0 0.0
  %1297 = vmatpush1.msra.mxu0 0.0
  %1298 = vmatprep.subr.mxu0 0.0
  %1299 = vmatpush1.msra.mxu0 0.0
  %1300 = vmatprep.subr.mxu0 0.0
  %1301 = vmatpush1.msra.mxu0 0.0
  %1302 = vmatprep.subr.mxu0 0.0
  %1303 = vmatpush1.msra.mxu0 0.0
  %1304 = vmatprep.subr.mxu0 0.0
  %1305 = vmatpush1.msra.mxu0 0.0
  %1306 = vmatprep.subr.mxu0 0.0
  %1307 = vmatpush1.msra.mxu0 0.0
  %1308 = vmatprep.subr.mxu0 0.0
  %1309 = vmatpush1.msra.mxu0 0.0
  %1310 = vmatprep.subr.mxu0 0.0
  %1311 = vmatpush1.msra.mxu0 0.0
  %1312 = vmatprep.subr.mxu0 0.0
  %1313 = vmatpush1.msra.mxu0 0.0
  %1314 = vmatprep.subr.mxu0 0.0
  %1315 = vmatpush1.msra.mxu0 0.0
  %1316 = vmatprep.subr.mxu0 0.0
  %1317 = vmatpush1.msra.mxu0 0.0
  %1318 = vmatprep.subr.mxu0 0.0
  %1319 = vmatpush1.msra.mxu0 0.0
  %1320 = vmatprep.subr.mxu0 0.0
  %1321 = vmatpush1.msra.mxu0 0.0
  %1322 = vmatprep.subr.mxu0 0.0
  %1323 = vmatpush1.msra.mxu0 0.0
  %1324 = vmatprep.mubr.f32.mxu0 0.0
  %1325 = vmatmul.mubr.f32.gmra.mrb[0].mxu0 %v1086
  %v1326 = vpop.f32.mrb[0].mxu0
  %v1327 = vadd.f32 %v1069, %v1326
  %v1328 = vpop.f32.mrb[0].mxu0
  %v1329 = vadd.f32 %v1071, %v1328
  %1330 = vmatprep.mubr.f32.mxu0 0.0
  %1331 = vmatmul.mubr.f32.gmra.mrb[0].mxu0 %v1089
  %v1332 = vpop.f32.mrb[0].mxu0
  %v1333 = vadd.f32 %v1075, %v1332
  %v1334 = vpop.f32.mrb[0].mxu0
  %v1335 = vadd.f32 %v1077, %v1334
  %1336 = vmatprep.mubr.f32.mxu0 0.0
  %1337 = vmatmul.mubr.f32.gmra.mrb[0].mxu0 %v1092
  %v1338 = vpop.f32.mrb[0].mxu0
  %v1339 = vadd.f32 %v1081, %v1338
  %v1340 = vpop.f32.mrb[0].mxu0
  %v1341 = vadd.f32 %v1083, %v1340
  %1342 = vdwg.mxu0
  %s1343 = scalar_lea.vmem %s4, 48
  %v1344 = vld [vmem:[%s1343] sm:$0xff]
  %v1345 = vld [vmem:[%s1343 + $0x8] sm:$0xff]
  %v1346 = vld [vmem:[%s1343 + $0x10] sm:$0xff]
  %1347 = vrot.lane.b32.xlu0 %v786, 110
  %v1348 = vpop.permute.xlu0 %1347
  %1349 = vrot.lane.b32.xlu0 %v787, 110
  %v1350 = vpop.permute.xlu0 %1349
  %1351 = vrot.lane.b32.xlu0 %v788, 110
  %v1352 = vpop.permute.xlu0 %1351
  %1353 = vrot.lane.b32.xlu0 %v789, 110
  %v1354 = vpop.permute.xlu0 %1353
  %1355 = vrot.lane.b32.xlu0 %v790, 110
  %v1356 = vpop.permute.xlu0 %1355
  %1357 = vrot.lane.b32.xlu0 %v791, 110
  %v1358 = vpop.permute.xlu0 %1357
  %1359 = vrot.lane.b32.xlu0 %v792, 110
  %v1360 = vpop.permute.xlu0 %1359
  %v1361 = vsel %vm97, %v1348, %v1350
  %v1362 = vsel %vm97, %v1350, %v1352
  %v1363 = vsel %vm97, %v1352, %v1354
  %v1364 = vsel %vm97, %v1354, %v1356
  %v1365 = vsel %vm97, %v1356, %v1358
  %v1366 = vsel %vm97, %v1358, %v1360
  %v1374 = vsel %vm826, %v1344, 0
  %v1377 = vsel %vm826, %v1345, 0
  %v1380 = vsel %vm826, %v1346, 0
  %1382 = vmatprep.subr.mxu0 %v1362
  %1383 = vmatpush1.msra.mxu0 %v1361
  %1384 = vmatprep.subr.mxu0 0.0
  %1385 = vmatpush1.msra.mxu0 0.0
  %1386 = vmatprep.subr.mxu0 0.0
  %1387 = vmatpush1.msra.mxu0 0.0
  %1388 = vmatprep.subr.mxu0 0.0
  %1389 = vmatpush1.msra.mxu0 0.0
  %1390 = vmatprep.subr.mxu0 0.0
  %1391 = vmatpush1.msra.mxu0 0.0
  %1392 = vmatprep.subr.mxu0 0.0
  %1393 = vmatpush1.msra.mxu0 0.0
  %1394 = vmatprep.subr.mxu0 0.0
  %1395 = vmatpush1.msra.mxu0 0.0
  %1396 = vmatprep.subr.mxu0 0.0
  %1397 = vmatpush1.msra.mxu0 0.0
  %1398 = vmatprep.subr.mxu0 0.0
  %1399 = vmatpush1.msra.mxu0 0.0
  %1400 = vmatprep.subr.mxu0 0.0
  %1401 = vmatpush1.msra.mxu0 0.0
  %1402 = vmatprep.subr.mxu0 0.0
  %1403 = vmatpush1.msra.mxu0 0.0
  %1404 = vmatprep.subr.mxu0 0.0
  %1405 = vmatpush1.msra.mxu0 0.0
  %1406 = vmatprep.subr.mxu0 0.0
  %1407 = vmatpush1.msra.mxu0 0.0
  %1408 = vmatprep.subr.mxu0 0.0
  %1409 = vmatpush1.msra.mxu0 0.0
  %1410 = vmatprep.subr.mxu0 0.0
  %1411 = vmatpush1.msra.mxu0 0.0
  %1412 = vmatprep.subr.mxu0 0.0
  %1413 = vmatpush1.msra.mxu0 0.0
  %1414 = vmatprep.subr.mxu0 0.0
  %1415 = vmatpush1.msra.mxu0 0.0
  %1416 = vmatprep.subr.mxu0 0.0
  %1417 = vmatpush1.msra.mxu0 0.0
  %1418 = vmatprep.subr.mxu0 0.0
  %1419 = vmatpush1.msra.mxu0 0.0
  %1420 = vmatprep.subr.mxu0 0.0
  %1421 = vmatpush1.msra.mxu0 0.0
  %1422 = vmatprep.subr.mxu0 0.0
  %1423 = vmatpush1.msra.mxu0 0.0
  %1424 = vmatprep.subr.mxu0 0.0
  %1425 = vmatpush1.msra.mxu0 0.0
  %1426 = vmatprep.subr.mxu0 0.0
  %1427 = vmatpush1.msra.mxu0 0.0
  %1428 = vmatprep.subr.mxu0 0.0
  %1429 = vmatpush1.msra.mxu0 0.0
  %1430 = vmatprep.subr.mxu0 0.0
  %1431 = vmatpush1.msra.mxu0 0.0
  %1432 = vmatprep.subr.mxu0 0.0
  %1433 = vmatpush1.msra.mxu0 0.0
  %1434 = vmatprep.subr.mxu0 0.0
  %1435 = vmatpush1.msra.mxu0 0.0
  %1436 = vmatprep.subr.mxu0 0.0
  %1437 = vmatpush1.msra.mxu0 0.0
  %1438 = vmatprep.subr.mxu0 0.0
  %1439 = vmatpush1.msra.mxu0 0.0
  %1440 = vmatprep.subr.mxu0 0.0
  %1441 = vmatpush1.msra.mxu0 0.0
  %1442 = vmatprep.subr.mxu0 0.0
  %1443 = vmatpush1.msra.mxu0 0.0
  %1444 = vmatprep.subr.mxu0 0.0
  %1445 = vmatpush1.msra.mxu0 0.0
  %1446 = vmatprep.mubr.f32.mxu0 0.0
  %1447 = vmatmul.mubr.f32.gmra.mrb[0].mxu0 %v1374
  %v1448 = vpop.f32.mrb[0].mxu0
  %v1449 = vadd.f32 0.0, %v1448
  %v1450 = vpop.f32.mrb[0].mxu0
  %v1451 = vadd.f32 0.0, %v1450
  %1452 = vmatprep.mubr.f32.mxu0 0.0
  %1453 = vmatmul.mubr.f32.gmra.mrb[0].mxu0 %v1377
  %v1454 = vpop.f32.mrb[0].mxu0
  %v1455 = vadd.f32 0.0, %v1454
  %v1456 = vpop.f32.mrb[0].mxu0
  %v1457 = vadd.f32 0.0, %v1456
  %1458 = vmatprep.mubr.f32.mxu0 0.0
  %1459 = vmatmul.mubr.f32.gmra.mrb[0].mxu0 %v1380
  %v1460 = vpop.f32.mrb[0].mxu0
  %v1461 = vadd.f32 0.0, %v1460
  %v1462 = vpop.f32.mrb[0].mxu0
  %v1463 = vadd.f32 0.0, %v1462
  %1464 = vdwg.mxu0
  %1465 = vmatprep.subr.mxu0 %v1364
  %1466 = vmatpush1.msra.mxu0 %v1363
  %1467 = vmatprep.subr.mxu0 0.0
  %1468 = vmatpush1.msra.mxu0 0.0
  %1469 = vmatprep.subr.mxu0 0.0
  %1470 = vmatpush1.msra.mxu0 0.0
  %1471 = vmatprep.subr.mxu0 0.0
  %1472 = vmatpush1.msra.mxu0 0.0
  %1473 = vmatprep.subr.mxu0 0.0
  %1474 = vmatpush1.msra.mxu0 0.0
  %1475 = vmatprep.subr.mxu0 0.0
  %1476 = vmatpush1.msra.mxu0 0.0
  %1477 = vmatprep.subr.mxu0 0.0
  %1478 = vmatpush1.msra.mxu0 0.0
  %1479 = vmatprep.subr.mxu0 0.0
  %1480 = vmatpush1.msra.mxu0 0.0
  %1481 = vmatprep.subr.mxu0 0.0
  %1482 = vmatpush1.msra.mxu0 0.0
  %1483 = vmatprep.subr.mxu0 0.0
  %1484 = vmatpush1.msra.mxu0 0.0
  %1485 = vmatprep.subr.mxu0 0.0
  %1486 = vmatpush1.msra.mxu0 0.0
  %1487 = vmatprep.subr.mxu0 0.0
  %1488 = vmatpush1.msra.mxu0 0.0
  %1489 = vmatprep.subr.mxu0 0.0
  %1490 = vmatpush1.msra.mxu0 0.0
  %1491 = vmatprep.subr.mxu0 0.0
  %1492 = vmatpush1.msra.mxu0 0.0
  %1493 = vmatprep.subr.mxu0 0.0
  %1494 = vmatpush1.msra.mxu0 0.0
  %1495 = vmatprep.subr.mxu0 0.0
  %1496 = vmatpush1.msra.mxu0 0.0
  %1497 = vmatprep.subr.mxu0 0.0
  %1498 = vmatpush1.msra.mxu0 0.0
  %1499 = vmatprep.subr.mxu0 0.0
  %1500 = vmatpush1.msra.mxu0 0.0
  %1501 = vmatprep.subr.mxu0 0.0
  %1502 = vmatpush1.msra.mxu0 0.0
  %1503 = vmatprep.subr.mxu0 0.0
  %1504 = vmatpush1.msra.mxu0 0.0
  %1505 = vmatprep.subr.mxu0 0.0
  %1506 = vmatpush1.msra.mxu0 0.0
  %1507 = vmatprep.subr.mxu0 0.0
  %1508 = vmatpush1.msra.mxu0 0.0
  %1509 = vmatprep.subr.mxu0 0.0
  %1510 = vmatpush1.msra.mxu0 0.0
  %1511 = vmatprep.subr.mxu0 0.0
  %1512 = vmatpush1.msra.mxu0 0.0
  %1513 = vmatprep.subr.mxu0 0.0
  %1514 = vmatpush1.msra.mxu0 0.0
  %1515 = vmatprep.subr.mxu0 0.0
  %1516 = vmatpush1.msra.mxu0 0.0
  %1517 = vmatprep.subr.mxu0 0.0
  %1518 = vmatpush1.msra.mxu0 0.0
  %1519 = vmatprep.subr.mxu0 0.0
  %1520 = vmatpush1.msra.mxu0 0.0
  %1521 = vmatprep.subr.mxu0 0.0
  %1522 = vmatpush1.msra.mxu0 0.0
  %1523 = vmatprep.subr.mxu0 0.0
  %1524 = vmatpush1.msra.mxu0 0.0
  %1525 = vmatprep.subr.mxu0 0.0
  %1526 = vmatpush1.msra.mxu0 0.0
  %1527 = vmatprep.subr.mxu0 0.0
  %1528 = vmatpush1.msra.mxu0 0.0
  %1529 = vmatprep.mubr.f32.mxu0 0.0
  %1530 = vmatmul.mubr.f32.gmra.mrb[0].mxu0 %v1374
  %v1531 = vpop.f32.mrb[0].mxu0
  %v1532 = vadd.f32 0.0, %v1531
  %v1533 = vpop.f32.mrb[0].mxu0
  %v1534 = vadd.f32 0.0, %v1533
  %1535 = vmatprep.mubr.f32.mxu0 0.0
  %1536 = vmatmul.mubr.f32.gmra.mrb[0].mxu0 %v1377
  %v1537 = vpop.f32.mrb[0].mxu0
  %v1538 = vadd.f32 0.0, %v1537
  %v1539 = vpop.f32.mrb[0].mxu0
  %v1540 = vadd.f32 0.0, %v1539
  %1541 = vmatprep.mubr.f32.mxu0 0.0
  %1542 = vmatmul.mubr.f32.gmra.mrb[0].mxu0 %v1380
  %v1543 = vpop.f32.mrb[0].mxu0
  %v1544 = vadd.f32 0.0, %v1543
  %v1545 = vpop.f32.mrb[0].mxu0
  %v1546 = vadd.f32 0.0, %v1545
  %1547 = vdwg.mxu0
  %1548 = vmatprep.subr.mxu0 %v1366
  %1549 = vmatpush1.msra.mxu0 %v1365
  %1550 = vmatprep.subr.mxu0 0.0
  %1551 = vmatpush1.msra.mxu0 0.0
  %1552 = vmatprep.subr.mxu0 0.0
  %1553 = vmatpush1.msra.mxu0 0.0
  %1554 = vmatprep.subr.mxu0 0.0
  %1555 = vmatpush1.msra.mxu0 0.0
  %1556 = vmatprep.subr.mxu0 0.0
  %1557 = vmatpush1.msra.mxu0 0.0
  %1558 = vmatprep.subr.mxu0 0.0
  %1559 = vmatpush1.msra.mxu0 0.0
  %1560 = vmatprep.subr.mxu0 0.0
  %1561 = vmatpush1.msra.mxu0 0.0
  %1562 = vmatprep.subr.mxu0 0.0
  %1563 = vmatpush1.msra.mxu0 0.0
  %1564 = vmatprep.subr.mxu0 0.0
  %1565 = vmatpush1.msra.mxu0 0.0
  %1566 = vmatprep.subr.mxu0 0.0
  %1567 = vmatpush1.msra.mxu0 0.0
  %1568 = vmatprep.subr.mxu0 0.0
  %1569 = vmatpush1.msra.mxu0 0.0
  %1570 = vmatprep.subr.mxu0 0.0
  %1571 = vmatpush1.msra.mxu0 0.0
  %1572 = vmatprep.subr.mxu0 0.0
  %1573 = vmatpush1.msra.mxu0 0.0
  %1574 = vmatprep.subr.mxu0 0.0
  %1575 = vmatpush1.msra.mxu0 0.0
  %1576 = vmatprep.subr.mxu0 0.0
  %1577 = vmatpush1.msra.mxu0 0.0
  %1578 = vmatprep.subr.mxu0 0.0
  %1579 = vmatpush1.msra.mxu0 0.0
  %1580 = vmatprep.subr.mxu0 0.0
  %1581 = vmatpush1.msra.mxu0 0.0
  %1582 = vmatprep.subr.mxu0 0.0
  %1583 = vmatpush1.msra.mxu0 0.0
  %1584 = vmatprep.subr.mxu0 0.0
  %1585 = vmatpush1.msra.mxu0 0.0
  %1586 = vmatprep.subr.mxu0 0.0
  %1587 = vmatpush1.msra.mxu0 0.0
  %1588 = vmatprep.subr.mxu0 0.0
  %1589 = vmatpush1.msra.mxu0 0.0
  %1590 = vmatprep.subr.mxu0 0.0
  %1591 = vmatpush1.msra.mxu0 0.0
  %1592 = vmatprep.subr.mxu0 0.0
  %1593 = vmatpush1.msra.mxu0 0.0
  %1594 = vmatprep.subr.mxu0 0.0
  %1595 = vmatpush1.msra.mxu0 0.0
  %1596 = vmatprep.subr.mxu0 0.0
  %1597 = vmatpush1.msra.mxu0 0.0
  %1598 = vmatprep.subr.mxu0 0.0
  %1599 = vmatpush1.msra.mxu0 0.0
  %1600 = vmatprep.subr.mxu0 0.0
  %1601 = vmatpush1.msra.mxu0 0.0
  %1602 = vmatprep.subr.mxu0 0.0
  %1603 = vmatpush1.msra.mxu0 0.0
  %1604 = vmatprep.subr.mxu0 0.0
  %1605 = vmatpush1.msra.mxu0 0.0
  %1606 = vmatprep.subr.mxu0 0.0
  %1607 = vmatpush1.msra.mxu0 0.0
  %1608 = vmatprep.subr.mxu0 0.0
  %1609 = vmatpush1.msra.mxu0 0.0
  %1610 = vmatprep.subr.mxu0 0.0
  %1611 = vmatpush1.msra.mxu0 0.0
  %1612 = vmatprep.mubr.f32.mxu0 0.0
  %1613 = vmatmul.mubr.f32.gmra.mrb[0].mxu0 %v1374
  %v1614 = vpop.f32.mrb[0].mxu0
  %v1615 = vadd.f32 0.0, %v1614
  %v1616 = vpop.f32.mrb[0].mxu0
  %v1617 = vadd.f32 0.0, %v1616
  %1618 = vmatprep.mubr.f32.mxu0 0.0
  %1619 = vmatmul.mubr.f32.gmra.mrb[0].mxu0 %v1377
  %v1620 = vpop.f32.mrb[0].mxu0
  %v1621 = vadd.f32 0.0, %v1620
  %v1622 = vpop.f32.mrb[0].mxu0
  %v1623 = vadd.f32 0.0, %v1622
  %1624 = vmatprep.mubr.f32.mxu0 0.0
  %1625 = vmatmul.mubr.f32.gmra.mrb[0].mxu0 %v1380
  %v1626 = vpop.f32.mrb[0].mxu0
  %v1627 = vadd.f32 0.0, %v1626
  %v1628 = vpop.f32.mrb[0].mxu0
  %v1629 = vadd.f32 0.0, %v1628
  %1630 = vdwg.mxu0
  %v1631 = vadd.f32 %v1161, %v1449
  %v1632 = vadd.f32 %v1163, %v1451
  %v1633 = vadd.f32 %v1244, %v1532
  %v1634 = vadd.f32 %v1246, %v1534
  %v1635 = vadd.f32 %v1327, %v1615
  %v1636 = vadd.f32 %v1329, %v1617
  %v1637 = vadd.f32 %v1167, %v1455
  %v1638 = vadd.f32 %v1169, %v1457
  %v1639 = vadd.f32 %v1250, %v1538
  %v1640 = vadd.f32 %v1252, %v1540
  %v1641 = vadd.f32 %v1333, %v1621
  %v1642 = vadd.f32 %v1335, %v1623
  %v1643 = vadd.f32 %v1173, %v1461
  %v1644 = vadd.f32 %v1175, %v1463
  %v1645 = vadd.f32 %v1256, %v1544
  %v1646 = vadd.f32 %v1258, %v1546
  %v1647 = vadd.f32 %v1339, %v1627
  %v1648 = vadd.f32 %v1341, %v1629
  %s1649 = scalar_lea.vmem %s4, 72
  %v1650 = vld [vmem:[%s1649] sm:$0xff]
  %v1651 = vld [vmem:[%s1649 + $0x8] sm:$0xff]
  %v1652 = vld [vmem:[%s1649 + $0x10] sm:$0xff]
  %1653 = vrot.lane.b32.xlu0 %v786, 109
  %v1654 = vpop.permute.xlu0 %1653
  %1655 = vrot.lane.b32.xlu0 %v787, 109
  %v1656 = vpop.permute.xlu0 %1655
  %1657 = vrot.lane.b32.xlu0 %v788, 109
  %v1658 = vpop.permute.xlu0 %1657
  %1659 = vrot.lane.b32.xlu0 %v789, 109
  %v1660 = vpop.permute.xlu0 %1659
  %1661 = vrot.lane.b32.xlu0 %v790, 109
  %v1662 = vpop.permute.xlu0 %1661
  %1663 = vrot.lane.b32.xlu0 %v791, 109
  %v1664 = vpop.permute.xlu0 %1663
  %1665 = vrot.lane.b32.xlu0 %v792, 109
  %v1666 = vpop.permute.xlu0 %1665
  %v1667 = vsel %vm123, %v1654, %v1656
  %v1668 = vsel %vm123, %v1656, %v1658
  %v1669 = vsel %vm123, %v1658, %v1660
  %v1670 = vsel %vm123, %v1660, %v1662
  %v1671 = vsel %vm123, %v1662, %v1664
  %v1672 = vsel %vm123, %v1664, %v1666
  %v1680 = vsel %vm826, %v1650, 0
  %v1683 = vsel %vm826, %v1651, 0
  %v1686 = vsel %vm826, %v1652, 0
  %1688 = vmatprep.subr.mxu0 %v1668
  %1689 = vmatpush1.msra.mxu0 %v1667
  %1690 = vmatprep.subr.mxu0 0.0
  %1691 = vmatpush1.msra.mxu0 0.0
  %1692 = vmatprep.subr.mxu0 0.0
  %1693 = vmatpush1.msra.mxu0 0.0
  %1694 = vmatprep.subr.mxu0 0.0
  %1695 = vmatpush1.msra.mxu0 0.0
  %1696 = vmatprep.subr.mxu0 0.0
  %1697 = vmatpush1.msra.mxu0 0.0
  %1698 = vmatprep.subr.mxu0 0.0
  %1699 = vmatpush1.msra.mxu0 0.0
  %1700 = vmatprep.subr.mxu0 0.0
  %1701 = vmatpush1.msra.mxu0 0.0
  %1702 = vmatprep.subr.mxu0 0.0
  %1703 = vmatpush1.msra.mxu0 0.0
  %1704 = vmatprep.subr.mxu0 0.0
  %1705 = vmatpush1.msra.mxu0 0.0
  %1706 = vmatprep.subr.mxu0 0.0
  %1707 = vmatpush1.msra.mxu0 0.0
  %1708 = vmatprep.subr.mxu0 0.0
  %1709 = vmatpush1.msra.mxu0 0.0
  %1710 = vmatprep.subr.mxu0 0.0
  %1711 = vmatpush1.msra.mxu0 0.0
  %1712 = vmatprep.subr.mxu0 0.0
  %1713 = vmatpush1.msra.mxu0 0.0
  %1714 = vmatprep.subr.mxu0 0.0
  %1715 = vmatpush1.msra.mxu0 0.0
  %1716 = vmatprep.subr.mxu0 0.0
  %1717 = vmatpush1.msra.mxu0 0.0
  %1718 = vmatprep.subr.mxu0 0.0
  %1719 = vmatpush1.msra.mxu0 0.0
  %1720 = vmatprep.subr.mxu0 0.0
  %1721 = vmatpush1.msra.mxu0 0.0
  %1722 = vmatprep.subr.mxu0 0.0
  %1723 = vmatpush1.msra.mxu0 0.0
  %1724 = vmatprep.subr.mxu0 0.0
  %1725 = vmatpush1.msra.mxu0 0.0
  %1726 = vmatprep.subr.mxu0 0.0
  %1727 = vmatpush1.msra.mxu0 0.0
  %1728 = vmatprep.subr.mxu0 0.0
  %1729 = vmatpush1.msra.mxu0 0.0
  %1730 = vmatprep.subr.mxu0 0.0
  %1731 = vmatpush1.msra.mxu0 0.0
  %1732 = vmatprep.subr.mxu0 0.0
  %1733 = vmatpush1.msra.mxu0 0.0
  %1734 = vmatprep.subr.mxu0 0.0
  %1735 = vmatpush1.msra.mxu0 0.0
  %1736 = vmatprep.subr.mxu0 0.0
  %1737 = vmatpush1.msra.mxu0 0.0
  %1738 = vmatprep.subr.mxu0 0.0
  %1739 = vmatpush1.msra.mxu0 0.0
  %1740 = vmatprep.subr.mxu0 0.0
  %1741 = vmatpush1.msra.mxu0 0.0
  %1742 = vmatprep.subr.mxu0 0.0
  %1743 = vmatpush1.msra.mxu0 0.0
  %1744 = vmatprep.subr.mxu0 0.0
  %1745 = vmatpush1.msra.mxu0 0.0
  %1746 = vmatprep.subr.mxu0 0.0
  %1747 = vmatpush1.msra.mxu0 0.0
  %1748 = vmatprep.subr.mxu0 0.0
  %1749 = vmatpush1.msra.mxu0 0.0
  %1750 = vmatprep.subr.mxu0 0.0
  %1751 = vmatpush1.msra.mxu0 0.0
  %1752 = vmatprep.mubr.f32.mxu0 0.0
  %1753 = vmatmul.mubr.f32.gmra.mrb[0].mxu0 %v1680
  %v1754 = vpop.f32.mrb[0].mxu0
  %v1755 = vadd.f32 0.0, %v1754
  %v1756 = vpop.f32.mrb[0].mxu0
  %v1757 = vadd.f32 0.0, %v1756
  %1758 = vmatprep.mubr.f32.mxu0 0.0
  %1759 = vmatmul.mubr.f32.gmra.mrb[0].mxu0 %v1683
  %v1760 = vpop.f32.mrb[0].mxu0
  %v1761 = vadd.f32 0.0, %v1760
  %v1762 = vpop.f32.mrb[0].mxu0
  %v1763 = vadd.f32 0.0, %v1762
  %1764 = vmatprep.mubr.f32.mxu0 0.0
  %1765 = vmatmul.mubr.f32.gmra.mrb[0].mxu0 %v1686
  %v1766 = vpop.f32.mrb[0].mxu0
  %v1767 = vadd.f32 0.0, %v1766
  %v1768 = vpop.f32.mrb[0].mxu0
  %v1769 = vadd.f32 0.0, %v1768
  %1770 = vdwg.mxu0
  %1771 = vmatprep.subr.mxu0 %v1670
  %1772 = vmatpush1.msra.mxu0 %v1669
  %1773 = vmatprep.subr.mxu0 0.0
  %1774 = vmatpush1.msra.mxu0 0.0
  %1775 = vmatprep.subr.mxu0 0.0
  %1776 = vmatpush1.msra.mxu0 0.0
  %1777 = vmatprep.subr.mxu0 0.0
  %1778 = vmatpush1.msra.mxu0 0.0
  %1779 = vmatprep.subr.mxu0 0.0
  %1780 = vmatpush1.msra.mxu0 0.0
  %1781 = vmatprep.subr.mxu0 0.0
  %1782 = vmatpush1.msra.mxu0 0.0
  %1783 = vmatprep.subr.mxu0 0.0
  %1784 = vmatpush1.msra.mxu0 0.0
  %1785 = vmatprep.subr.mxu0 0.0
  %1786 = vmatpush1.msra.mxu0 0.0
  %1787 = vmatprep.subr.mxu0 0.0
  %1788 = vmatpush1.msra.mxu0 0.0
  %1789 = vmatprep.subr.mxu0 0.0
  %1790 = vmatpush1.msra.mxu0 0.0
  %1791 = vmatprep.subr.mxu0 0.0
  %1792 = vmatpush1.msra.mxu0 0.0
  %1793 = vmatprep.subr.mxu0 0.0
  %1794 = vmatpush1.msra.mxu0 0.0
  %1795 = vmatprep.subr.mxu0 0.0
  %1796 = vmatpush1.msra.mxu0 0.0
  %1797 = vmatprep.subr.mxu0 0.0
  %1798 = vmatpush1.msra.mxu0 0.0
  %1799 = vmatprep.subr.mxu0 0.0
  %1800 = vmatpush1.msra.mxu0 0.0
  %1801 = vmatprep.subr.mxu0 0.0
  %1802 = vmatpush1.msra.mxu0 0.0
  %1803 = vmatprep.subr.mxu0 0.0
  %1804 = vmatpush1.msra.mxu0 0.0
  %1805 = vmatprep.subr.mxu0 0.0
  %1806 = vmatpush1.msra.mxu0 0.0
  %1807 = vmatprep.subr.mxu0 0.0
  %1808 = vmatpush1.msra.mxu0 0.0
  %1809 = vmatprep.subr.mxu0 0.0
  %1810 = vmatpush1.msra.mxu0 0.0
  %1811 = vmatprep.subr.mxu0 0.0
  %1812 = vmatpush1.msra.mxu0 0.0
  %1813 = vmatprep.subr.mxu0 0.0
  %1814 = vmatpush1.msra.mxu0 0.0
  %1815 = vmatprep.subr.mxu0 0.0
  %1816 = vmatpush1.msra.mxu0 0.0
  %1817 = vmatprep.subr.mxu0 0.0
  %1818 = vmatpush1.msra.mxu0 0.0
  %1819 = vmatprep.subr.mxu0 0.0
  %1820 = vmatpush1.msra.mxu0 0.0
  %1821 = vmatprep.subr.mxu0 0.0
  %1822 = vmatpush1.msra.mxu0 0.0
  %1823 = vmatprep.subr.mxu0 0.0
  %1824 = vmatpush1.msra.mxu0 0.0
  %1825 = vmatprep.subr.mxu0 0.0
  %1826 = vmatpush1.msra.mxu0 0.0
  %1827 = vmatprep.subr.mxu0 0.0
  %1828 = vmatpush1.msra.mxu0 0.0
  %1829 = vmatprep.subr.mxu0 0.0
  %1830 = vmatpush1.msra.mxu0 0.0
  %1831 = vmatprep.subr.mxu0 0.0
  %1832 = vmatpush1.msra.mxu0 0.0
  %1833 = vmatprep.subr.mxu0 0.0
  %1834 = vmatpush1.msra.mxu0 0.0
  %1835 = vmatprep.mubr.f32.mxu0 0.0
  %1836 = vmatmul.mubr.f32.gmra.mrb[0].mxu0 %v1680
  %v1837 = vpop.f32.mrb[0].mxu0
  %v1838 = vadd.f32 0.0, %v1837
  %v1839 = vpop.f32.mrb[0].mxu0
  %v1840 = vadd.f32 0.0, %v1839
  %1841 = vmatprep.mubr.f32.mxu0 0.0
  %1842 = vmatmul.mubr.f32.gmra.mrb[0].mxu0 %v1683
  %v1843 = vpop.f32.mrb[0].mxu0
  %v1844 = vadd.f32 0.0, %v1843
  %v1845 = vpop.f32.mrb[0].mxu0
  %v1846 = vadd.f32 0.0, %v1845
  %1847 = vmatprep.mubr.f32.mxu0 0.0
  %1848 = vmatmul.mubr.f32.gmra.mrb[0].mxu0 %v1686
  %v1849 = vpop.f32.mrb[0].mxu0
  %v1850 = vadd.f32 0.0, %v1849
  %v1851 = vpop.f32.mrb[0].mxu0
  %v1852 = vadd.f32 0.0, %v1851
  %1853 = vdwg.mxu0
  %1854 = vmatprep.subr.mxu0 %v1672
  %1855 = vmatpush1.msra.mxu0 %v1671
  %1856 = vmatprep.subr.mxu0 0.0
  %1857 = vmatpush1.msra.mxu0 0.0
  %1858 = vmatprep.subr.mxu0 0.0
  %1859 = vmatpush1.msra.mxu0 0.0
  %1860 = vmatprep.subr.mxu0 0.0
  %1861 = vmatpush1.msra.mxu0 0.0
  %1862 = vmatprep.subr.mxu0 0.0
  %1863 = vmatpush1.msra.mxu0 0.0
  %1864 = vmatprep.subr.mxu0 0.0
  %1865 = vmatpush1.msra.mxu0 0.0
  %1866 = vmatprep.subr.mxu0 0.0
  %1867 = vmatpush1.msra.mxu0 0.0
  %1868 = vmatprep.subr.mxu0 0.0
  %1869 = vmatpush1.msra.mxu0 0.0
  %1870 = vmatprep.subr.mxu0 0.0
  %1871 = vmatpush1.msra.mxu0 0.0
  %1872 = vmatprep.subr.mxu0 0.0
  %1873 = vmatpush1.msra.mxu0 0.0
  %1874 = vmatprep.subr.mxu0 0.0
  %1875 = vmatpush1.msra.mxu0 0.0
  %1876 = vmatprep.subr.mxu0 0.0
  %1877 = vmatpush1.msra.mxu0 0.0
  %1878 = vmatprep.subr.mxu0 0.0
  %1879 = vmatpush1.msra.mxu0 0.0
  %1880 = vmatprep.subr.mxu0 0.0
  %1881 = vmatpush1.msra.mxu0 0.0
  %1882 = vmatprep.subr.mxu0 0.0
  %1883 = vmatpush1.msra.mxu0 0.0
  %1884 = vmatprep.subr.mxu0 0.0
  %1885 = vmatpush1.msra.mxu0 0.0
  %1886 = vmatprep.subr.mxu0 0.0
  %1887 = vmatpush1.msra.mxu0 0.0
  %1888 = vmatprep.subr.mxu0 0.0
  %1889 = vmatpush1.msra.mxu0 0.0
  %1890 = vmatprep.subr.mxu0 0.0
  %1891 = vmatpush1.msra.mxu0 0.0
  %1892 = vmatprep.subr.mxu0 0.0
  %1893 = vmatpush1.msra.mxu0 0.0
  %1894 = vmatprep.subr.mxu0 0.0
  %1895 = vmatpush1.msra.mxu0 0.0
  %1896 = vmatprep.subr.mxu0 0.0
  %1897 = vmatpush1.msra.mxu0 0.0
  %1898 = vmatprep.subr.mxu0 0.0
  %1899 = vmatpush1.msra.mxu0 0.0
  %1900 = vmatprep.subr.mxu0 0.0
  %1901 = vmatpush1.msra.mxu0 0.0
  %1902 = vmatprep.subr.mxu0 0.0
  %1903 = vmatpush1.msra.mxu0 0.0
  %1904 = vmatprep.subr.mxu0 0.0
  %1905 = vmatpush1.msra.mxu0 0.0
  %1906 = vmatprep.subr.mxu0 0.0
  %1907 = vmatpush1.msra.mxu0 0.0
  %1908 = vmatprep.subr.mxu0 0.0
  %1909 = vmatpush1.msra.mxu0 0.0
  %1910 = vmatprep.subr.mxu0 0.0
  %1911 = vmatpush1.msra.mxu0 0.0
  %1912 = vmatprep.subr.mxu0 0.0
  %1913 = vmatpush1.msra.mxu0 0.0
  %1914 = vmatprep.subr.mxu0 0.0
  %1915 = vmatpush1.msra.mxu0 0.0
  %1916 = vmatprep.subr.mxu0 0.0
  %1917 = vmatpush1.msra.mxu0 0.0
  %1918 = vmatprep.mubr.f32.mxu0 0.0
  %1919 = vmatmul.mubr.f32.gmra.mrb[0].mxu0 %v1680
  %v1920 = vpop.f32.mrb[0].mxu0
  %v1921 = vadd.f32 0.0, %v1920
  %v1922 = vpop.f32.mrb[0].mxu0
  %v1923 = vadd.f32 0.0, %v1922
  %1924 = vmatprep.mubr.f32.mxu0 0.0
  %1925 = vmatmul.mubr.f32.gmra.mrb[0].mxu0 %v1683
  %v1926 = vpop.f32.mrb[0].mxu0
  %v1927 = vadd.f32 0.0, %v1926
  %v1928 = vpop.f32.mrb[0].mxu0
  %v1929 = vadd.f32 0.0, %v1928
  %1930 = vmatprep.mubr.f32.mxu0 0.0
  %1931 = vmatmul.mubr.f32.gmra.mrb[0].mxu0 %v1686
  %v1932 = vpop.f32.mrb[0].mxu0
  %v1933 = vadd.f32 0.0, %v1932
  %v1934 = vpop.f32.mrb[0].mxu0
  %v1935 = vadd.f32 0.0, %v1934
  %1936 = vdwg.mxu0
  %v1937 = vadd.f32 %v1631, %v1755
  %v1938 = vadd.f32 %v1632, %v1757
  %v1939 = vadd.f32 %v1633, %v1838
  %v1940 = vadd.f32 %v1634, %v1840
  %v1941 = vadd.f32 %v1635, %v1921
  %v1942 = vadd.f32 %v1636, %v1923
  %v1943 = vadd.f32 %v1637, %v1761
  %v1944 = vadd.f32 %v1638, %v1763
  %v1945 = vadd.f32 %v1639, %v1844
  %v1946 = vadd.f32 %v1640, %v1846
  %v1947 = vadd.f32 %v1641, %v1927
  %v1948 = vadd.f32 %v1642, %v1929
  %v1949 = vadd.f32 %v1643, %v1767
  %v1950 = vadd.f32 %v1644, %v1769
  %v1951 = vadd.f32 %v1645, %v1850
  %v1952 = vadd.f32 %v1646, %v1852
  %v1953 = vadd.f32 %v1647, %v1933
  %v1954 = vadd.f32 %v1648, %v1935
  %v1955 = vld [vmem:[%s5] sm:$0xff]
  %v1956 = vld [vmem:[%s5 + $0x8] sm:$0xff]
  %v1957 = vld [vmem:[%s5 + $0x10] sm:$0xff]
  %1959 = vset.pattern.permute.xlu0 0
  %1960 = vperm.xlu0 %1959, %v1955
  %v1961 = vpop.permute.xlu0 %1960
  %1964 = vset.pattern.permute.xlu0 0
  %1965 = vperm.xlu0 %1964, %v1956
  %v1966 = vpop.permute.xlu0 %1965
  %1969 = vset.pattern.permute.xlu0 0
  %1970 = vperm.xlu0 %1969, %v1957
  %v1971 = vpop.permute.xlu0 %1970
  %v1973 = vadd.f32 %v1937, %v1961
  %v1974 = vadd.f32 %v1938, %v1961
  %v1975 = vadd.f32 %v1939, %v1961
  %v1976 = vadd.f32 %v1940, %v1961
  %v1977 = vadd.f32 %v1941, %v1961
  %v1978 = vadd.f32 %v1942, %v1961
  %v1979 = vadd.f32 %v1943, %v1966
  %v1980 = vadd.f32 %v1944, %v1966
  %v1981 = vadd.f32 %v1945, %v1966
  %v1982 = vadd.f32 %v1946, %v1966
  %v1983 = vadd.f32 %v1947, %v1966
  %v1984 = vadd.f32 %v1948, %v1966
  %v1985 = vadd.f32 %v1949, %v1971
  %v1986 = vadd.f32 %v1950, %v1971
  %v1987 = vadd.f32 %v1951, %v1971
  %v1988 = vadd.f32 %v1952, %v1971
  %v1989 = vadd.f32 %v1953, %v1971
  %v1990 = vadd.f32 %v1954, %v1971
  %v1991 = vmax.f32 %v1973, 0.0
  %v1992 = vmax.f32 %v1974, 0.0
  %v1993 = vmax.f32 %v1975, 0.0
  %v1994 = vmax.f32 %v1976, 0.0
  %v1995 = vmax.f32 %v1977, 0.0
  %v1996 = vmax.f32 %v1978, 0.0
  %v1997 = vmax.f32 %v1979, 0.0
  %v1998 = vmax.f32 %v1980, 0.0
  %v1999 = vmax.f32 %v1981, 0.0
  %v2000 = vmax.f32 %v1982, 0.0
  %v2001 = vmax.f32 %v1983, 0.0
  %v2002 = vmax.f32 %v1984, 0.0
  %v2003 = vmax.f32 %v1985, 0.0
  %v2004 = vmax.f32 %v1986, 0.0
  %v2005 = vmax.f32 %v1987, 0.0
  %v2006 = vmax.f32 %v1988, 0.0
  %v2007 = vmax.f32 %v1989, 0.0
  %v2008 = vmax.f32 %v1990, 0.0
  %2009 = vst [vmem:[%s6] sm:$0xff] %v1991
  %2010 = vst [vmem:[%s6 + $0x8] sm:$0xff] %v1992
  %2011 = vst [vmem:[%s6 + $0x10] sm:$0xff] %v1993
  %2012 = vst [vmem:[%s6 + $0x18] sm:$0xff] %v1994
  %2013 = vst [vmem:[%s6 + $0x20] sm:$0xff] %v1995
  %2014 = vst [vmem:[%s6 + $0x28] sm:$0xff] %v1996
  %2015 = vst [vmem:[%s6 + $0x30] sm:$0xff] %v1997
  %2016 = vst [vmem:[%s6 + $0x38] sm:$0xff] %v1998
  %2017 = vst [vmem:[%s6 + $0x40] sm:$0xff] %v1999
  %2018 = vst [vmem:[%s6 + $0x48] sm:$0xff] %v2000
  %2019 = vst [vmem:[%s6 + $0x50] sm:$0xff] %v2001
  %2020 = vst [vmem:[%s6 + $0x58] sm:$0xff] %v2002
  %2021 = vst [vmem:[%s6 + $0x60] sm:$0xff] %v2003
  %2022 = vst [vmem:[%s6 + $0x68] sm:$0xff] %v2004
  %2023 = vst [vmem:[%s6 + $0x70] sm:$0xff] %v2005
  %2024 = vst [vmem:[%s6 + $0x78] sm:$0xff] %v2006
  %2025 = vst [vmem:[%s6 + $0x80] sm:$0xff] %v2007
  %2026 = vst [vmem:[%s6 + $0x88] sm:$0xff] %v2008
  // Predicated region
  $region26: #{decoder_block_forward.1} parent=0 // pred_check
    _
  $region27: #{decoder_block_forward.1} parent=0 // pred_check_branch
    %2028 = sbr.rel (0) target = $region29
  $region28: #{decoder_block_forward.1} parent=0 // pred_region
    _
  $region29: #{decoder_block_forward.1} parent=0 // pred_fallthru
    _
  // Predicated region
  $region30: #{decoder_block_forward.1} parent=0 // pred_check
    _
  $region31: #{decoder_block_forward.1} parent=0 // pred_check_branch
    %2030 = sbr.rel (0) target = $region33
  $region32: #{decoder_block_forward.1} parent=0 // pred_region
    _
  $region33: #{decoder_block_forward.1} parent=0 // pred_fallthru
    _

</llo_original>
